<compile_context>
chip_gen: v7x
topology: tpu7x:2x2x1
jax: 0.10.0
libtpu: 0.0.40
codegen_flags: <defaults>
</compile_context>

<pallas_src>
import functools

import jax
import jax.numpy as jnp
from jax import lax
from jax.experimental import pallas as pl
from jax.experimental.pallas import tpu as pltpu

LN_EPS = 1e-5
BN_EPS = 1e-5


def _conv_module_kernel(x_hbm, ln_g_ref, ln_b_ref, w1_ref, wd_ref, bn_t_ref,
                        w2_ref, o_ref, xbuf, gbuf, copy_sem, *,
                        seq_len, t_tile, pad, n_t, compute_dtype):
    b = pl.program_id(0)
    i = pl.program_id(1)
    t_win = t_tile + 2 * pad

    # ------------------------------------------------------------------
    # Halo-window DMA plan.  The window for tile t covers global rows
    # [t*t_tile - pad, t*t_tile + t_tile + pad); buffer row r holds global row
    # t*t_tile - pad + r.  Edge tiles copy only the rows that exist in x (all
    # copy lengths are Python-static); rows outside [0, seq_len) are never read
    # from HBM and are masked to zero (the conv's 'SAME' zero padding) before
    # the depthwise conv, so stale buffer contents there are harmless.
    # ------------------------------------------------------------------
    def window_copies(t_idx, slot):
        copies = []  # list of (condition | None, AsyncCopyDescriptor)

        def add(cond, src_start, length, dst_off):
            cp = pltpu.make_async_copy(
                x_hbm.at[b, pl.ds(src_start, length), :],
                xbuf.at[slot, pl.ds(dst_off, length), :],
                copy_sem.at[slot])
            copies.append((cond, cp))

        if n_t == 1:
            add(None, 0, seq_len, pad)
            return copies

        # first tile: left halo is zero padding
        first_len = min(seq_len, t_tile + pad)
        add(t_idx == 0, 0, first_len, pad)

        # last tile: right halo is zero padding (copy length is static)
        last_start = (n_t - 1) * t_tile - pad
        add(t_idx == n_t - 1, last_start, seq_len - last_start, 0)

        if n_t > 2:
            pen_start = (n_t - 2) * t_tile - pad
            pen_len = min(t_win, seq_len - pen_start)
            if pen_len < t_win:
                # penultimate tile's right halo is clipped by the sequence end
                add(t_idx == n_t - 2, pen_start, pen_len, 0)
                if n_t > 3:
                    add((t_idx > 0) & (t_idx < n_t - 2),
                        t_idx * t_tile - pad, t_win, 0)
            else:
                add((t_idx > 0) & (t_idx < n_t - 1),
                    t_idx * t_tile - pad, t_win, 0)
        return copies

    def _guarded(cond, fn):
        if cond is None:
            fn()
        else:
            @pl.when(cond)
            def _():
                fn()

    def start_window(t_idx, slot):
        for cond, cp in window_copies(t_idx, slot):
            _guarded(cond, cp.start)

    def wait_window(t_idx, slot):
        for cond, cp in window_copies(t_idx, slot):
            _guarded(cond, cp.wait)

    slot = i % 2

    # Prime the pipeline on the first tile of each batch row.
    @pl.when(i == 0)
    def _():
        start_window(i, slot)

    # Wait for this tile's window, then prefetch the next tile's window into
    # the other slot so its DMA overlaps this tile's compute.
    wait_window(i, slot)

    @pl.when(i + 1 < n_t)
    def _():
        start_window(i + 1, 1 - slot)

    x = xbuf[slot].astype(jnp.float32)                        # (t_win, E)

    # ---- LayerNorm over embed dim (centered two-pass variance) ----
    mean = jnp.mean(x, axis=-1, keepdims=True)
    xc = x - mean
    var = jnp.mean(xc * xc, axis=-1, keepdims=True)
    x_ln = xc * lax.rsqrt(var + LN_EPS)
    x_ln = x_ln * ln_g_ref[...] + ln_b_ref[...]               # (t_win, E)

    # ---- pointwise_conv1 (fused, pre-transposed (E, 2C) weight) + GLU ----
    ab = jnp.dot(x_ln.astype(compute_dtype), w1_ref[...],
                 preferred_element_type=jnp.float32)          # (t_win, 2C)
    C = ab.shape[-1] // 2
    g = ab[:, :C] * jax.nn.sigmoid(ab[:, C:])                 # (t_win, C)

    # Zero rows outside [0, seq_len): emulates the zero padding the depthwise
    # Conv1d applies at the sequence boundaries and kills stale buffer rows.
    g_row = (i * t_tile - pad) + lax.broadcasted_iota(jnp.int32, (t_win, 1), 0)
    valid = (g_row >= 0) & (g_row < seq_len)
    gbuf[...] = jnp.where(valid, g, 0.0)                      # stage GLU output in VMEM

    # ---- depthwise conv along T: each tap is a static-offset VMEM load.
    #      BatchNorm scale is pre-folded into wd in the wrapper. ----
    K = wd_ref.shape[0]
    acc = jnp.zeros((t_tile, C), jnp.float32)
    for k in range(K):                                        # static unrolled loop
        acc = acc + gbuf[k:k + t_tile, :] * wd_ref[k:k + 1, :]

    # ---- folded BatchNorm shift + Swish/SiLU ----
    z = acc + bn_t_ref[...]                                   # (t_tile, C)
    z = z * jax.nn.sigmoid(z)

    # ---- pointwise_conv2 (pre-transposed (C, E) weight) ----
    out = jnp.dot(z.astype(compute_dtype), w2_ref[...],
                  preferred_element_type=jnp.float32)         # (t_tile, E)

    o_ref[0] = out.astype(o_ref.dtype)


def conformer_conv_module(x, params, *, t_tile=None, compute_dtype=jnp.bfloat16,
                          max_tile=256):
    """x: (B, T, E) in the PyTorch "B X T X C" layout.  Returns (B, T, E)."""
    B, T, E = x.shape
    w1 = params["w1"]                                       # (2C, E)  pointwise_conv1
    wd = params["wd"]                                       # (C, K)   depthwise weight
    w2 = params["w2"]                                       # (E, C)   pointwise_conv2
    C = w1.shape[0] // 2
    K = wd.shape[1]
    assert (K - 1) % 2 == 0, "kernel_size should be a odd number for 'SAME' padding"
    pad = (K - 1) // 2

    # ---- sequence tiling: one tile for short sequences, else 256-row tiles ----
    if t_tile is None:
        t_tile = T if T <= max_tile + pad else max_tile
    t_tile = min(t_tile, T)
    n_t = pl.cdiv(T, t_tile)
    if n_t > 1:
        assert t_tile % 8 == 0, "t_tile must be a multiple of 8 when tiling T"
        assert t_tile >= pad, "t_tile must be >= (K-1)//2"
    t_win = t_tile + 2 * pad

    # ---- one-time wrapper-side weight prep (outside the kernel) ----
    w1_t = jnp.transpose(w1).astype(compute_dtype)          # (E, 2C): [:, :C]=lin, [:, C:]=gate
    w2_t = jnp.transpose(w2).astype(compute_dtype)          # (C, E)
    bn_s = params["bn_g"] * lax.rsqrt(params["bn_v"] + BN_EPS)            # (C,)
    bn_t = (params["bn_b"] - params["bn_m"] * bn_s).reshape(1, C).astype(jnp.float32)
    wd_s = (jnp.transpose(wd) * bn_s[None, :]).astype(jnp.float32)        # (K, C), BN folded
    ln_g = params["ln_g"].reshape(1, E).astype(jnp.float32)
    ln_b = params["ln_b"].reshape(1, E).astype(jnp.float32)

    kernel = functools.partial(_conv_module_kernel, seq_len=T, t_tile=t_tile,
                               pad=pad, n_t=n_t, compute_dtype=compute_dtype)

    # ---- explicit VMEM budget (set vmem_limit_bytes with headroom) ----
    xbytes = jnp.dtype(x.dtype).itemsize
    cbytes = jnp.dtype(compute_dtype).itemsize
    est_vmem = (2 * t_win * E * xbytes                       # double-buffered halo windows
                + t_win * C * 4                              # staged GLU output
                + 2 * t_tile * E * xbytes                    # pipelined output block
                + (E * 2 * C + C * E) * cbytes               # pointwise weights
                + (K * C + C + 2 * E) * 4)                   # depthwise / BN / LN params
    vmem_limit = int(min(64 << 20, max(32 << 20, 2 * est_vmem)))

    cost = pl.CostEstimate(
        flops=int(2 * B * T * (E * 2 * C + C * E) + 2 * B * T * K * C),
        transcendentals=int(2 * B * T * C),
        bytes_accessed=int(xbytes * 2 * B * T * E
                           + cbytes * (w1_t.size + w2_t.size)
                           + 4 * (wd_s.size + bn_t.size + ln_g.size + ln_b.size)),
    )

    return pl.pallas_call(
        kernel,
        out_shape=jax.ShapeDtypeStruct((B, T, E), x.dtype),
        grid_spec=pltpu.PrefetchScalarGridSpec(
            num_scalar_prefetch=0,
            grid=(B, n_t),
            in_specs=[
                pl.BlockSpec(memory_space=pl.ANY),               # x (raw HBM; manual halo DMA)
                pl.BlockSpec((1, E), lambda b, i: (0, 0)),       # LayerNorm gamma
                pl.BlockSpec((1, E), lambda b, i: (0, 0)),       # LayerNorm beta
                pl.BlockSpec((E, 2 * C), lambda b, i: (0, 0)),   # fused pw1 weight (pre-transposed)
                pl.BlockSpec((K, C), lambda b, i: (0, 0)),       # depthwise weight * BN scale
                pl.BlockSpec((1, C), lambda b, i: (0, 0)),       # folded BN shift
                pl.BlockSpec((C, E), lambda b, i: (0, 0)),       # pw2 weight (pre-transposed)
            ],
            out_specs=pl.BlockSpec((1, t_tile, E), lambda b, i: (b, i, 0)),
            scratch_shapes=[
                pltpu.VMEM((2, t_win, E), x.dtype),              # halo windows (double buffer)
                pltpu.VMEM((t_win, C), jnp.float32),             # staged GLU output
                pltpu.SemaphoreType.DMA((2,)),                   # per-slot DMA semaphores
            ],
        ),
        compiler_params=pltpu.CompilerParams(
            dimension_semantics=("parallel", "arbitrary"),
            vmem_limit_bytes=vmem_limit),
        cost_estimate=cost,
    )(x, ln_g, ln_b, w1_t, wd_s, bn_t, w2_t)


def reference(x, p):
    """Pure-JAX reference of the same forward pass (raw PyTorch-layout params)."""
    mean = x.mean(-1, keepdims=True)
    var = ((x - mean) ** 2).mean(-1, keepdims=True)
    xl = (x - mean) / jnp.sqrt(var + LN_EPS) * p["ln_g"] + p["ln_b"]
    ab = xl @ p["w1"].T                                      # (B, T, 2C)
    C = ab.shape[-1] // 2
    g = ab[..., :C] * jax.nn.sigmoid(ab[..., C:])            # (B, T, C)
    K = p["wd"].shape[1]
    pad = (K - 1) // 2
    gp = jnp.pad(g, ((0, 0), (pad, pad), (0, 0)))
    d = sum(gp[:, k:k + g.shape[1], :] * p["wd"][:, k] for k in range(K))
    z = (d - p["bn_m"]) / jnp.sqrt(p["bn_v"] + BN_EPS) * p["bn_g"] + p["bn_b"]
    z = z * jax.nn.sigmoid(z)
    return z @ p["w2"].T


def make_params(key, embed_dim, channels, kernel_size):
    """Parameters in their native PyTorch layouts; the wrapper does all the folding."""
    ks = jax.random.split(key, 9)
    s = lambda k, shape, scale=0.1: scale * jax.random.normal(k, shape, jnp.float32)
    return {
        "ln_g": 1.0 + s(ks[0], (embed_dim,)),
        "ln_b": s(ks[1], (embed_dim,)),
        "w1": s(ks[2], (2 * channels, embed_dim)),           # pointwise_conv1 weight (2C, E)
        "wd": s(ks[3], (channels, kernel_size)),             # depthwise weight (C, K)
        "bn_g": 1.0 + s(ks[4], (channels,)),
        "bn_b": s(ks[5], (channels,)),
        "bn_m": s(ks[6], (channels,)),
        "bn_v": 1.0 + 0.1 * jax.nn.softplus(jax.random.normal(ks[7], (channels,))),
        "w2": s(ks[8], (embed_dim, channels)),               # pointwise_conv2 weight (E, C)
    }


if __name__ == "__main__":
    # Small but lane-aligned demo config (E, C multiples of 128).  T=40 is chosen
    # so that the forced t_tile=16 path exercises first / interior / last halo
    # tiles plus a partial (8-row) final output block.
    B, T, E, C, K = 2, 40, 128, 128, 7

    key = jax.random.PRNGKey(0)
    kx, kp = jax.random.split(key)
    x = jax.random.normal(kx, (B, T, E), jnp.float32)
    params = make_params(kp, E, C, K)

    ref = reference(x, params)

    # 1) f32 MXU operands, auto (single-tile) path: tight check vs reference.
    out_f32 = jax.block_until_ready(
        conformer_conv_module(x, params, compute_dtype=jnp.float32))
    assert out_f32.shape == (B, T, E)
    assert jnp.allclose(out_f32, ref, rtol=1e-4, atol=1e-4), "f32 mismatch vs reference"

    # 2) f32, forced multi-tile path (halo DMAs, uneven tail): tight check.
    out_tiled = jax.block_until_ready(
        conformer_conv_module(x, params, t_tile=16, compute_dtype=jnp.float32))
    assert jnp.allclose(out_tiled, ref, rtol=1e-4, atol=1e-4), "tiled f32 mismatch"

    # 3) default bf16 MXU operands (perf default), multi-tile: loose check.
    out_bf16 = jax.block_until_ready(conformer_conv_module(x, params, t_tile=16))
    assert jnp.allclose(out_bf16, ref, rtol=1e-1, atol=1e-1), "bf16 mismatch vs reference"

    # 4) bf16 activations end-to-end (halves HBM traffic on x / out).
    out_b = jax.block_until_ready(
        conformer_conv_module(x.astype(jnp.bfloat16), params))
    assert out_b.dtype == jnp.bfloat16
    assert jnp.allclose(out_b.astype(jnp.float32), ref, rtol=1.5e-1, atol=1.5e-1), \
        "bf16-activation mismatch vs reference"

    print("KERNEL_OK")
</pallas_src>

<mosaic_0001>
module attributes {stable_mosaic.version = 11 : i64} {
  func.func @_conv_module_kernel(%arg0: i32, %arg1: i32, %arg2: memref<2x40x128xf32, #tpu.memory_space<any>>, %arg3: memref<1x128xf32, #tpu.memory_space<vmem>>, %arg4: memref<1x128xf32, #tpu.memory_space<vmem>>, %arg5: memref<128x256xf32, #tpu.memory_space<vmem>>, %arg6: memref<7x128xf32, #tpu.memory_space<vmem>>, %arg7: memref<1x128xf32, #tpu.memory_space<vmem>>, %arg8: memref<128x128xf32, #tpu.memory_space<vmem>>, %arg9: memref<1x40x128xf32, #tpu.memory_space<vmem>>, %arg10: memref<2x46x128xf32, #tpu.memory_space<vmem>>, %arg11: memref<46x128xf32, #tpu.memory_space<vmem>>, %arg12: memref<2x!tpu.dma_semaphore, #tpu.memory_space<semaphore_mem>>) attributes {dimension_semantics = [#tpu.dimension_semantics<parallel>, #tpu.dimension_semantics<arbitrary>], iteration_bounds = array<i64: 2, 1>, scalar_prefetch = 0 : i64, scratch_operands = 3 : i64, tpu.core_type = #tpu.core_type<tc>, window_params = [{}, {pipeline_mode = #tpu.pipeline_mode<synchronous>, transform_indices = @transform_1, window_bounds = array<i64: 1, 128>}, {pipeline_mode = #tpu.pipeline_mode<synchronous>, transform_indices = @transform_2, window_bounds = array<i64: 1, 128>}, {pipeline_mode = #tpu.pipeline_mode<synchronous>, transform_indices = @transform_3, window_bounds = array<i64: 128, 256>}, {pipeline_mode = #tpu.pipeline_mode<synchronous>, transform_indices = @transform_4, window_bounds = array<i64: 7, 128>}, {pipeline_mode = #tpu.pipeline_mode<synchronous>, transform_indices = @transform_5, window_bounds = array<i64: 1, 128>}, {pipeline_mode = #tpu.pipeline_mode<synchronous>, transform_indices = @transform_6, window_bounds = array<i64: 128, 128>}, {transform_indices = @transform_7, window_bounds = array<i64: 1, 40, 128>}]} {
    %c2_i32 = arith.constant 2 : i32
    %c0_i32 = arith.constant 0 : i32
    %0 = arith.cmpi eq, %c2_i32, %c0_i32 : i32
    %c1_i32 = arith.constant 1 : i32
    %1 = arith.select %0, %c1_i32, %c2_i32 : i32
    %2 = arith.remsi %arg1, %1 : i32
    %c0_i32_0 = arith.constant 0 : i32
    %3 = arith.cmpi ne, %2, %c0_i32_0 : i32
    %c0_i32_1 = arith.constant 0 : i32
    %4 = arith.cmpi slt, %2, %c0_i32_1 : i32
    %c0_i32_2 = arith.constant 0 : i32
    %5 = arith.cmpi slt, %1, %c0_i32_2 : i32
    %6 = arith.xori %4, %5 : i1
    %7 = arith.andi %6, %3 : i1
    %8 = arith.addi %2, %1 : i32
    %9 = arith.select %7, %8, %2 : i32
    %c0_i32_3 = arith.constant 0 : i32
    %10 = arith.cmpi eq, %arg1, %c0_i32_3 : i32
    %11 = arith.extui %10 : i1 to i32
    %c0_i32_4 = arith.constant 0 : i32
    %12 = arith.cmpi ne, %11, %c0_i32_4 : i32
    scf.if %12 {
      %c0_i32_62 = arith.constant 0 : i32
      %c0_i32_63 = arith.constant 0 : i32
      %123 = tpu.memref_slice %arg2[%arg0, %c0_i32_62, %c0_i32_63] : memref<2x40x128xf32, #tpu.memory_space<any>> -> memref<1x40x128xf32, #tpu.memory_space<any>>
      %124 = tpu.memref_squeeze %123 : memref<1x40x128xf32, #tpu.memory_space<any>> -> memref<40x128xf32, #tpu.memory_space<any>>
      %c3_i32_64 = arith.constant 3 : i32
      %c0_i32_65 = arith.constant 0 : i32
      %125 = tpu.memref_slice %arg10[%9, %c3_i32_64, %c0_i32_65] : memref<2x46x128xf32, #tpu.memory_space<vmem>> -> memref<1x40x128xf32, #tpu.memory_space<vmem>>
      %126 = tpu.memref_squeeze %125 : memref<1x40x128xf32, #tpu.memory_space<vmem>> -> memref<40x128xf32, #tpu.memory_space<vmem>>
      %127 = tpu.memref_slice %arg12[%9] : memref<2x!tpu.dma_semaphore, #tpu.memory_space<semaphore_mem>> -> memref<1x!tpu.dma_semaphore, #tpu.memory_space<semaphore_mem>>
      %128 = tpu.memref_squeeze %127 : memref<1x!tpu.dma_semaphore, #tpu.memory_space<semaphore_mem>> -> memref<!tpu.dma_semaphore, #tpu.memory_space<semaphore_mem>>
      tpu.enqueue_dma source(%124 : memref<40x128xf32, #tpu.memory_space<any>>) target(%126 : memref<40x128xf32, #tpu.memory_space<vmem>>) target_semaphore(%128 : memref<!tpu.dma_semaphore, #tpu.memory_space<semaphore_mem>>)
    } else {
    }
    %c0_i32_5 = arith.constant 0 : i32
    %c0_i32_6 = arith.constant 0 : i32
    %13 = tpu.memref_slice %arg2[%arg0, %c0_i32_5, %c0_i32_6] : memref<2x40x128xf32, #tpu.memory_space<any>> -> memref<1x40x128xf32, #tpu.memory_space<any>>
    %14 = tpu.memref_squeeze %13 : memref<1x40x128xf32, #tpu.memory_space<any>> -> memref<40x128xf32, #tpu.memory_space<any>>
    %c3_i32 = arith.constant 3 : i32
    %c0_i32_7 = arith.constant 0 : i32
    %15 = tpu.memref_slice %arg10[%9, %c3_i32, %c0_i32_7] : memref<2x46x128xf32, #tpu.memory_space<vmem>> -> memref<1x40x128xf32, #tpu.memory_space<vmem>>
    %16 = tpu.memref_squeeze %15 : memref<1x40x128xf32, #tpu.memory_space<vmem>> -> memref<40x128xf32, #tpu.memory_space<vmem>>
    %17 = tpu.memref_slice %arg12[%9] : memref<2x!tpu.dma_semaphore, #tpu.memory_space<semaphore_mem>> -> memref<1x!tpu.dma_semaphore, #tpu.memory_space<semaphore_mem>>
    %18 = tpu.memref_squeeze %17 : memref<1x!tpu.dma_semaphore, #tpu.memory_space<semaphore_mem>> -> memref<!tpu.dma_semaphore, #tpu.memory_space<semaphore_mem>>
    tpu.wait_dma2 semaphore(%18 : memref<!tpu.dma_semaphore, #tpu.memory_space<semaphore_mem>>) src(%14 : memref<40x128xf32, #tpu.memory_space<any>>) dst(%16 : memref<40x128xf32, #tpu.memory_space<vmem>>)
    %c1_i32_8 = arith.constant 1 : i32
    %19 = arith.addi %arg1, %c1_i32_8 : i32
    %c1_i32_9 = arith.constant 1 : i32
    %20 = arith.cmpi slt, %19, %c1_i32_9 : i32
    %21 = arith.extui %20 : i1 to i32
    %c0_i32_10 = arith.constant 0 : i32
    %22 = arith.cmpi ne, %21, %c0_i32_10 : i32
    scf.if %22 {
      %c1_i32_62 = arith.constant 1 : i32
      %123 = arith.subi %c1_i32_62, %9 : i32
      %c0_i32_63 = arith.constant 0 : i32
      %c0_i32_64 = arith.constant 0 : i32
      %124 = tpu.memref_slice %arg2[%arg0, %c0_i32_63, %c0_i32_64] : memref<2x40x128xf32, #tpu.memory_space<any>> -> memref<1x40x128xf32, #tpu.memory_space<any>>
      %125 = tpu.memref_squeeze %124 : memref<1x40x128xf32, #tpu.memory_space<any>> -> memref<40x128xf32, #tpu.memory_space<any>>
      %c3_i32_65 = arith.constant 3 : i32
      %c0_i32_66 = arith.constant 0 : i32
      %126 = tpu.memref_slice %arg10[%123, %c3_i32_65, %c0_i32_66] : memref<2x46x128xf32, #tpu.memory_space<vmem>> -> memref<1x40x128xf32, #tpu.memory_space<vmem>>
      %127 = tpu.memref_squeeze %126 : memref<1x40x128xf32, #tpu.memory_space<vmem>> -> memref<40x128xf32, #tpu.memory_space<vmem>>
      %128 = tpu.memref_slice %arg12[%123] : memref<2x!tpu.dma_semaphore, #tpu.memory_space<semaphore_mem>> -> memref<1x!tpu.dma_semaphore, #tpu.memory_space<semaphore_mem>>
      %129 = tpu.memref_squeeze %128 : memref<1x!tpu.dma_semaphore, #tpu.memory_space<semaphore_mem>> -> memref<!tpu.dma_semaphore, #tpu.memory_space<semaphore_mem>>
      tpu.enqueue_dma source(%125 : memref<40x128xf32, #tpu.memory_space<any>>) target(%127 : memref<40x128xf32, #tpu.memory_space<vmem>>) target_semaphore(%129 : memref<!tpu.dma_semaphore, #tpu.memory_space<semaphore_mem>>)
    } else {
    }
    %23 = arith.index_cast %9 : i32 to index
    %c0 = arith.constant 0 : index
    %c0_11 = arith.constant 0 : index
    %24 = vector.load %arg10[%23, %c0, %c0_11] : memref<2x46x128xf32, #tpu.memory_space<vmem>>, vector<1x46x128xf32>
    %25 = vector.shape_cast %24 : vector<1x46x128xf32> to vector<46x128xf32>
    %cst = arith.constant dense<0.000000e+00> : vector<46xf32>
    %26 = vector.multi_reduction <add>, %25, %cst [1] : vector<46x128xf32> to vector<46xf32>
    %27 = vector.shape_cast %26 : vector<46xf32> to vector<46x1xf32>
    %cst_12 = arith.constant 1.280000e+02 : f32
    %28 = vector.broadcast %cst_12 : f32 to vector<46x1xf32>
    %29 = arith.divf %27, %28 : vector<46x1xf32>
    %30 = vector.broadcast %29 : vector<46x1xf32> to vector<46x128xf32>
    %31 = arith.subf %25, %30 : vector<46x128xf32>
    %32 = arith.mulf %31, %31 : vector<46x128xf32>
    %cst_13 = arith.constant dense<0.000000e+00> : vector<46xf32>
    %33 = vector.multi_reduction <add>, %32, %cst_13 [1] : vector<46x128xf32> to vector<46xf32>
    %34 = vector.shape_cast %33 : vector<46xf32> to vector<46x1xf32>
    %cst_14 = arith.constant 1.280000e+02 : f32
    %35 = vector.broadcast %cst_14 : f32 to vector<46x1xf32>
    %36 = arith.divf %34, %35 : vector<46x1xf32>
    %cst_15 = arith.constant 9.99999974E-6 : f32
    %37 = vector.broadcast %cst_15 : f32 to vector<46x1xf32>
    %38 = arith.addf %36, %37 : vector<46x1xf32>
    %39 = math.rsqrt %38 : vector<46x1xf32>
    %40 = vector.broadcast %39 : vector<46x1xf32> to vector<46x128xf32>
    %41 = arith.mulf %31, %40 : vector<46x128xf32>
    %c0_16 = arith.constant 0 : index
    %c0_17 = arith.constant 0 : index
    %42 = vector.load %arg3[%c0_16, %c0_17] : memref<1x128xf32, #tpu.memory_space<vmem>>, vector<1x128xf32>
    %43 = vector.broadcast %42 : vector<1x128xf32> to vector<46x128xf32>
    %44 = arith.mulf %41, %43 : vector<46x128xf32>
    %c0_18 = arith.constant 0 : index
    %c0_19 = arith.constant 0 : index
    %45 = vector.load %arg4[%c0_18, %c0_19] : memref<1x128xf32, #tpu.memory_space<vmem>>, vector<1x128xf32>
    %46 = vector.broadcast %45 : vector<1x128xf32> to vector<46x128xf32>
    %47 = arith.addf %44, %46 : vector<46x128xf32>
    %c0_20 = arith.constant 0 : index
    %c0_21 = arith.constant 0 : index
    %48 = vector.load %arg5[%c0_20, %c0_21] : memref<128x256xf32, #tpu.memory_space<vmem>>, vector<128x256xf32>
    %cst_22 = arith.constant dense<0.000000e+00> : vector<46x256xf32>
    %49 = tpu.matmul %47, %48, %cst_22 {dimension_numbers = #tpu.dot_dimension_numbers<[1], [0], [0], [1], [0, 0, 1, 1], [], []>} : vector<46x128xf32>, vector<128x256xf32>, vector<46x256xf32> -> vector<46x256xf32>
    %50 = vector.extract_strided_slice %49 {offsets = [0, 0], sizes = [46, 128], strides = [1, 1]} : vector<46x256xf32> to vector<46x128xf32>
    %51 = vector.extract_strided_slice %49 {offsets = [0, 128], sizes = [46, 128], strides = [1, 1]} : vector<46x256xf32> to vector<46x128xf32>
    %52 = arith.negf %51 : vector<46x128xf32>
    %53 = math.exp %52 : vector<46x128xf32>
    %cst_23 = arith.constant 1.000000e+00 : f32
    %54 = vector.broadcast %cst_23 : f32 to vector<46x128xf32>
    %55 = arith.addf %54, %53 : vector<46x128xf32>
    %56 = arith.divf %54, %55 : vector<46x128xf32>
    %57 = arith.mulf %50, %56 : vector<46x128xf32>
    %c40_i32 = arith.constant 40 : i32
    %58 = arith.muli %arg1, %c40_i32 : i32
    %c3_i32_24 = arith.constant 3 : i32
    %59 = arith.subi %58, %c3_i32_24 : i32
    %60 = tpu.iota {dimensions = array<i32: 0>} : vector<46x1xi32>
    %61 = vector.broadcast %59 : i32 to vector<46x1xi32>
    %62 = arith.addi %61, %60 : vector<46x1xi32>
    %c0_i32_25 = arith.constant 0 : i32
    %63 = vector.broadcast %c0_i32_25 : i32 to vector<46x1xi32>
    %64 = arith.cmpi sge, %62, %63 : vector<46x1xi32>
    %c40_i32_26 = arith.constant 40 : i32
    %65 = vector.broadcast %c40_i32_26 : i32 to vector<46x1xi32>
    %66 = arith.cmpi slt, %62, %65 : vector<46x1xi32>
    %67 = arith.andi %64, %66 : vector<46x1xi1>
    %cst_27 = arith.constant 0.000000e+00 : f32
    %68 = vector.shape_cast %67 : vector<46x1xi1> to vector<46x1xi1>
    %69 = vector.broadcast %68 : vector<46x1xi1> to vector<46x128xi1>
    %70 = vector.broadcast %cst_27 : f32 to vector<46x128xf32>
    %71 = arith.select %69, %57, %70 : vector<46x128xi1>, vector<46x128xf32>
    %c0_28 = arith.constant 0 : index
    %c0_29 = arith.constant 0 : index
    %72 = vector.load %arg11[%c0_28, %c0_29] : memref<46x128xf32, #tpu.memory_space<vmem>>, vector<46x128xf32>
    tpu.vector_store %arg11[%c0_28, %c0_29], %71 {strides = array<i32>} : memref<46x128xf32, #tpu.memory_space<vmem>>, vector<46x128xf32>,
    %cst_30 = arith.constant 0.000000e+00 : f32
    %73 = vector.broadcast %cst_30 : f32 to vector<40x128xf32>
    %c0_31 = arith.constant 0 : index
    %c0_32 = arith.constant 0 : index
    %74 = vector.load %arg11[%c0_31, %c0_32] : memref<46x128xf32, #tpu.memory_space<vmem>>, vector<40x128xf32>
    %c0_33 = arith.constant 0 : index
    %c0_34 = arith.constant 0 : index
    %75 = vector.load %arg6[%c0_33, %c0_34] : memref<7x128xf32, #tpu.memory_space<vmem>>, vector<1x128xf32>
    %76 = vector.broadcast %75 : vector<1x128xf32> to vector<40x128xf32>
    %77 = arith.mulf %74, %76 : vector<40x128xf32>
    %78 = arith.addf %73, %77 : vector<40x128xf32>
    %c1 = arith.constant 1 : index
    %c0_35 = arith.constant 0 : index
    %79 = vector.load %arg11[%c1, %c0_35] : memref<46x128xf32, #tpu.memory_space<vmem>>, vector<40x128xf32>
    %c1_36 = arith.constant 1 : index
    %c0_37 = arith.constant 0 : index
    %80 = vector.load %arg6[%c1_36, %c0_37] : memref<7x128xf32, #tpu.memory_space<vmem>>, vector<1x128xf32>
    %81 = vector.broadcast %80 : vector<1x128xf32> to vector<40x128xf32>
    %82 = arith.mulf %79, %81 : vector<40x128xf32>
    %83 = arith.addf %78, %82 : vector<40x128xf32>
    %c2 = arith.constant 2 : index
    %c0_38 = arith.constant 0 : index
    %84 = vector.load %arg11[%c2, %c0_38] : memref<46x128xf32, #tpu.memory_space<vmem>>, vector<40x128xf32>
    %c2_39 = arith.constant 2 : index
    %c0_40 = arith.constant 0 : index
    %85 = vector.load %arg6[%c2_39, %c0_40] : memref<7x128xf32, #tpu.memory_space<vmem>>, vector<1x128xf32>
    %86 = vector.broadcast %85 : vector<1x128xf32> to vector<40x128xf32>
    %87 = arith.mulf %84, %86 : vector<40x128xf32>
    %88 = arith.addf %83, %87 : vector<40x128xf32>
    %c3 = arith.constant 3 : index
    %c0_41 = arith.constant 0 : index
    %89 = vector.load %arg11[%c3, %c0_41] : memref<46x128xf32, #tpu.memory_space<vmem>>, vector<40x128xf32>
    %c3_42 = arith.constant 3 : index
    %c0_43 = arith.constant 0 : index
    %90 = vector.load %arg6[%c3_42, %c0_43] : memref<7x128xf32, #tpu.memory_space<vmem>>, vector<1x128xf32>
    %91 = vector.broadcast %90 : vector<1x128xf32> to vector<40x128xf32>
    %92 = arith.mulf %89, %91 : vector<40x128xf32>
    %93 = arith.addf %88, %92 : vector<40x128xf32>
    %c4 = arith.constant 4 : index
    %c0_44 = arith.constant 0 : index
    %94 = vector.load %arg11[%c4, %c0_44] : memref<46x128xf32, #tpu.memory_space<vmem>>, vector<40x128xf32>
    %c4_45 = arith.constant 4 : index
    %c0_46 = arith.constant 0 : index
    %95 = vector.load %arg6[%c4_45, %c0_46] : memref<7x128xf32, #tpu.memory_space<vmem>>, vector<1x128xf32>
    %96 = vector.broadcast %95 : vector<1x128xf32> to vector<40x128xf32>
    %97 = arith.mulf %94, %96 : vector<40x128xf32>
    %98 = arith.addf %93, %97 : vector<40x128xf32>
    %c5 = arith.constant 5 : index
    %c0_47 = arith.constant 0 : index
    %99 = vector.load %arg11[%c5, %c0_47] : memref<46x128xf32, #tpu.memory_space<vmem>>, vector<40x128xf32>
    %c5_48 = arith.constant 5 : index
    %c0_49 = arith.constant 0 : index
    %100 = vector.load %arg6[%c5_48, %c0_49] : memref<7x128xf32, #tpu.memory_space<vmem>>, vector<1x128xf32>
    %101 = vector.broadcast %100 : vector<1x128xf32> to vector<40x128xf32>
    %102 = arith.mulf %99, %101 : vector<40x128xf32>
    %103 = arith.addf %98, %102 : vector<40x128xf32>
    %c6 = arith.constant 6 : index
    %c0_50 = arith.constant 0 : index
    %104 = vector.load %arg11[%c6, %c0_50] : memref<46x128xf32, #tpu.memory_space<vmem>>, vector<40x128xf32>
    %c6_51 = arith.constant 6 : index
    %c0_52 = arith.constant 0 : index
    %105 = vector.load %arg6[%c6_51, %c0_52] : memref<7x128xf32, #tpu.memory_space<vmem>>, vector<1x128xf32>
    %106 = vector.broadcast %105 : vector<1x128xf32> to vector<40x128xf32>
    %107 = arith.mulf %104, %106 : vector<40x128xf32>
    %108 = arith.addf %103, %107 : vector<40x128xf32>
    %c0_53 = arith.constant 0 : index
    %c0_54 = arith.constant 0 : index
    %109 = vector.load %arg7[%c0_53, %c0_54] : memref<1x128xf32, #tpu.memory_space<vmem>>, vector<1x128xf32>
    %110 = vector.broadcast %109 : vector<1x128xf32> to vector<40x128xf32>
    %111 = arith.addf %108, %110 : vector<40x128xf32>
    %112 = arith.negf %111 : vector<40x128xf32>
    %113 = math.exp %112 : vector<40x128xf32>
    %cst_55 = arith.constant 1.000000e+00 : f32
    %114 = vector.broadcast %cst_55 : f32 to vector<40x128xf32>
    %115 = arith.addf %114, %113 : vector<40x128xf32>
    %116 = arith.divf %114, %115 : vector<40x128xf32>
    %117 = arith.mulf %111, %116 : vector<40x128xf32>
    %c0_56 = arith.constant 0 : index
    %c0_57 = arith.constant 0 : index
    %118 = vector.load %arg8[%c0_56, %c0_57] : memref<128x128xf32, #tpu.memory_space<vmem>>, vector<128x128xf32>
    %cst_58 = arith.constant dense<0.000000e+00> : vector<40x128xf32>
    %119 = tpu.matmul %117, %118, %cst_58 {dimension_numbers = #tpu.dot_dimension_numbers<[1], [0], [0], [1], [0, 0, 1, 1], [], []>} : vector<40x128xf32>, vector<128x128xf32>, vector<40x128xf32> -> vector<40x128xf32>
    %c0_59 = arith.constant 0 : index
    %c0_60 = arith.constant 0 : index
    %c0_61 = arith.constant 0 : index
    %120 = vector.load %arg9[%c0_59, %c0_60, %c0_61] : memref<1x40x128xf32, #tpu.memory_space<vmem>>, vector<1x40x128xf32>
    %121 = vector.shape_cast %120 : vector<1x40x128xf32> to vector<40x128xf32>
    %122 = vector.shape_cast %119 : vector<40x128xf32> to vector<1x40x128xf32>
    tpu.vector_store %arg9[%c0_59, %c0_60, %c0_61], %122 {strides = array<i32>} : memref<1x40x128xf32, #tpu.memory_space<vmem>>, vector<1x40x128xf32>,
    return
  }
  func.func @transform_1(%arg0: i32, %arg1: i32) -> (i32, i32) {
    %c0_i32 = arith.constant 0 : i32
    %c0_i32_0 = arith.constant 0 : i32
    %c0_i32_1 = arith.constant 0 : i32
    return %c0_i32, %c0_i32_0 : i32, i32
  }
  func.func @transform_2(%arg0: i32, %arg1: i32) -> (i32, i32) {
    %c0_i32 = arith.constant 0 : i32
    %c0_i32_0 = arith.constant 0 : i32
    %c0_i32_1 = arith.constant 0 : i32
    return %c0_i32, %c0_i32_0 : i32, i32
  }
  func.func @transform_3(%arg0: i32, %arg1: i32) -> (i32, i32) {
    %c0_i32 = arith.constant 0 : i32
    %c0_i32_0 = arith.constant 0 : i32
    %c0_i32_1 = arith.constant 0 : i32
    return %c0_i32, %c0_i32_0 : i32, i32
  }
  func.func @transform_4(%arg0: i32, %arg1: i32) -> (i32, i32) {
    %c0_i32 = arith.constant 0 : i32
    %c0_i32_0 = arith.constant 0 : i32
    %c0_i32_1 = arith.constant 0 : i32
    return %c0_i32, %c0_i32_0 : i32, i32
  }
  func.func @transform_5(%arg0: i32, %arg1: i32) -> (i32, i32) {
    %c0_i32 = arith.constant 0 : i32
    %c0_i32_0 = arith.constant 0 : i32
    %c0_i32_1 = arith.constant 0 : i32
    return %c0_i32, %c0_i32_0 : i32, i32
  }
  func.func @transform_6(%arg0: i32, %arg1: i32) -> (i32, i32) {
    %c0_i32 = arith.constant 0 : i32
    %c0_i32_0 = arith.constant 0 : i32
    %c0_i32_1 = arith.constant 0 : i32
    return %c0_i32, %c0_i32_0 : i32, i32
  }
  func.func @transform_7(%arg0: i32, %arg1: i32) -> (i32, i32, i32) {
    %c0_i32 = arith.constant 0 : i32
    %c0_i32_0 = arith.constant 0 : i32
    return %arg0, %arg1, %c0_i32 : i32, i32, i32
  }
}

</mosaic_0001>

<llo_original>
// kernel: tpu_custom_call.1
$region0: #{tpu_custom_call.1}
  #allocation0 [shape = 'u32[]', space=smem, size = 0x4, offset = 0x4, fixed_abs, tag = 'smem constant byte address 0x4 - core index']
  #allocation1 [shape = 'u32[144,128]{1,0:T(1,128)}', space=vmem, size = 0x12000, scoped, tag = 'internal scratch']
  #allocation2 [shape = 'f32[2,46,128]{2,1,0:T(8,128)}', space=vmem, size = 0xc000, scoped, tag = 'scratch operand']
  #allocation3 [shape = 'f32[46,128]{1,0:T(8,128)}', space=vmem, size = 0x6000, scoped, tag = 'scratch operand']
  #allocation4 [shape = 's32[2]{0}', space=sflag, size = 0x8, scoped, tag = 'scratch operand']
  #allocation11 [shape = 's32[]', space=sflag, size = 0x4, offset = 0, fixed_abs, tag = 'sflag constant byte address 0x0 - dummy sync flag']
  #allocation12 [shape = 's32[]', space=sflag, size = 0x4, offset = 0, fixed_abs, tag = 'sflag constant byte address 0x0 - dummy sync flag']
  #allocation13 [shape = 'u32[]', space=smem, size = 0x4, offset = 0x44, fixed_abs, tag = 'smem constant byte address 0x44 - assertion arg 0']
  #allocation14 [shape = 'u32[]', space=smem, size = 0x4, offset = 0x48, fixed_abs, tag = 'smem constant byte address 0x48 - assertion arg 1']
  #allocation15 [shape = 's32[]', space=sflag, size = 0x4, offset = 0, fixed_abs, tag = 'sflag constant byte address 0x0 - dummy sync flag']
  #allocation16 [shape = 's32[]', space=sflag, size = 0x4, offset = 0, fixed_abs, tag = 'sflag constant byte address 0x0 - dummy sync flag']
  %s0 = inlined_call_operand.hbm [shape: f32[2,40,128], index: 0, kind: input, shape index: {}]
  %s1 = inlined_call_operand.vmem [shape: f32[1,128], index: 1, kind: input, shape index: {}]
  %s2 = inlined_call_operand.vmem [shape: f32[1,128], index: 2, kind: input, shape index: {}]
  %s3 = inlined_call_operand.hbm [shape: f32[128,256], index: 3, kind: input, shape index: {}]
  %s4 = inlined_call_operand.vmem [shape: f32[7,128], index: 4, kind: input, shape index: {}]
  %s5 = inlined_call_operand.vmem [shape: f32[1,128], index: 5, kind: input, shape index: {}]
  %s6 = inlined_call_operand.hbm [shape: f32[128,128], index: 6, kind: input, shape index: {}]
  %s7 = inlined_call_operand.hbm [shape: f32[2,40,128], index: 7, kind: output, shape index: {}]
  %s8 = sld [smem:[#allocation0]]
  $region81: #{tpu_custom_call.1} parent=0
    _
  %s10 = ssub.s32 1, %s8
  %s11 = scalar_select 0, %s10, %s8
  $region1: #{tpu_custom_call.1} parent=0
    #allocation5 [shape = 'u8[131072]{0}', space=vmem, size = 0x20000, scoped, tag = 'input window, operand 3, single buffered']
    #allocation6 [shape = 's32[2]{0}', space=sflag, size = 0x8, scoped, tag = 'scoped memory for tpu_custom_call.1']
    #allocation7 [shape = 's32[2]{0}', space=sflag, size = 0x8, scoped, tag = 'scoped memory for tpu_custom_call.1']
    #allocation8 [shape = 'u8[65536]{0}', space=vmem, size = 0x10000, scoped, tag = 'input window, operand 6, single buffered']
    #allocation9 [shape = 's32[1]{0}', space=sflag, size = 0x4, scoped, tag = 'scoped memory for tpu_custom_call.1']
    #allocation10 [shape = 'u8[40960]{0}', space=vmem, size = 0xa000, scoped, tag = 'output window, operand 0']
    %12 = vsyncpa [#allocation6], 0
    %13 = vsyncpa [#allocation9], 0
    %14 = vsyncpa [#allocation7], 0
    %s15 = scalar_lea.sflag [#allocation7], 1
    %16 = vsyncpa %s15, 0
    loop: start=0, step=1, limit=4
    $region2: #{tpu_custom_call.1} parent=1 // loop_pre_header
      _
    $region3: #{tpu_custom_call.1} parent=1 // loop_header
      %s18 = sphi 0, %s22
      %p19 = scmp.ge.s32.totalorder %s18, 4
      %s25 = sphi 0, %s37
      %s26 = sphi 0, %s33
      %s27 = sphi 0, %s25
      %s28 = sphi 0, %s26
      %s29 = sphi 0, %s27
      %s30 = sphi 0, %s28
      %s38 = sphi 0, %s38
      %s40 = sphi 0, %s38
      %s41 = sphi 0, %s40
      %s55 = sphi 0, %s41
      %s59 = sphi 0, %s59
      %s61 = sphi 0, %s59
      %s62 = sphi 0, %s61
      %s76 = sphi 0, %s62
      %s80 = sphi 0, %s80
      %s82 = sphi 0, %s80
      %s83 = sphi 0, %s82
      %s97 = sphi 0, %s83
      %s101 = sphi 0, %s101
      %s103 = sphi 0, %s101
      %s104 = sphi 0, %s103
      %s118 = sphi 0, %s104
      %s122 = sphi 0, %s122
      %s124 = sphi 0, %s122
      %s125 = sphi 0, %s124
      %s139 = sphi 0, %s125
      %s143 = sphi 0, %s143
      %s145 = sphi 0, %s143
      %s146 = sphi 0, %s145
      %s160 = sphi 0, %s146
      %s168 = sphi 0, %s170
      %s171 = sphi 0, %s168
      %s172 = sphi 0, %s171
      %s188 = sphi 0, %s172
    $region4: #{tpu_custom_call.1} parent=1 // loop_header_branch
      %21 = sbr.rel (%p19) target = $region8
    $region5: #{tpu_custom_call.1} parent=1 // loop_body
      %s23 = ssub.s32 %s18, 1
      %s24 = ssub.s32 %s18, 2
      %s31 = sadd.s32 1, %s26
      %p32 = scmp.ge.s32.totalorder %s31, 1
      %s33 = scalar_select %p32, 0, %s31
      %s34 = sadd.s32 1, %s25
      %s35 = scalar_select %p32, %s34, %s25
      %p36 = scmp.ge.s32.totalorder %s35, 2
      %s37 = scalar_select %p36, 0, %s35
      %s39 = sadd.s32 %s38, 1
      %p42 = scmp.eq.s32.totalorder %s18, 1
      %p43 = scmp.ne.s32.totalorder %s38, %s40
      %p44 = scmp.eq.s32.totalorder %s18, 0
      %p45 = por %p43, %p44
      %p46 = scmp.ne.s32.totalorder %s38, %s40
      %p47 = scmp.eq.s32.totalorder %s23, 1
      %p48 = por %p46, %p47
      %p49 = scmp.ne.s32.totalorder %s40, %s41
      %p50 = scmp.eq.s32.totalorder %s23, 0
      %p51 = por %p49, %p50
      %p52 = scmp.ne.s32.totalorder %s40, %s41
      %p53 = scmp.eq.s32.totalorder %s24, 1
      %p54 = por %p52, %p53
      %p56 = scmp.ne.s32.totalorder %s41, %s55
      %p57 = scmp.eq.s32.totalorder %s24, 0
      %p58 = por %p56, %p57
      %s60 = sadd.s32 %s59, 1
      %p63 = scmp.eq.s32.totalorder %s18, 1
      %p64 = scmp.ne.s32.totalorder %s59, %s61
      %p65 = scmp.eq.s32.totalorder %s18, 0
      %p66 = por %p64, %p65
      %p67 = scmp.ne.s32.totalorder %s59, %s61
      %p68 = scmp.eq.s32.totalorder %s23, 1
      %p69 = por %p67, %p68
      %p70 = scmp.ne.s32.totalorder %s61, %s62
      %p71 = scmp.eq.s32.totalorder %s23, 0
      %p72 = por %p70, %p71
      %p73 = scmp.ne.s32.totalorder %s61, %s62
      %p74 = scmp.eq.s32.totalorder %s24, 1
      %p75 = por %p73, %p74
      %p77 = scmp.ne.s32.totalorder %s62, %s76
      %p78 = scmp.eq.s32.totalorder %s24, 0
      %p79 = por %p77, %p78
      %s81 = sadd.s32 %s80, 1
      %p84 = scmp.eq.s32.totalorder %s18, 1
      %p85 = scmp.ne.s32.totalorder %s80, %s82
      %p86 = scmp.eq.s32.totalorder %s18, 0
      %p87 = por %p85, %p86
      %p88 = scmp.ne.s32.totalorder %s80, %s82
      %p89 = scmp.eq.s32.totalorder %s23, 1
      %p90 = por %p88, %p89
      %p91 = scmp.ne.s32.totalorder %s82, %s83
      %p92 = scmp.eq.s32.totalorder %s23, 0
      %p93 = por %p91, %p92
      %p94 = scmp.ne.s32.totalorder %s82, %s83
      %p95 = scmp.eq.s32.totalorder %s24, 1
      %p96 = por %p94, %p95
      %p98 = scmp.ne.s32.totalorder %s83, %s97
      %p99 = scmp.eq.s32.totalorder %s24, 0
      %p100 = por %p98, %p99
      %s102 = sadd.s32 %s101, 1
      %p105 = scmp.eq.s32.totalorder %s18, 1
      %p106 = scmp.ne.s32.totalorder %s101, %s103
      %p107 = scmp.eq.s32.totalorder %s18, 0
      %p108 = por %p106, %p107
      %p109 = scmp.ne.s32.totalorder %s101, %s103
      %p110 = scmp.eq.s32.totalorder %s23, 1
      %p111 = por %p109, %p110
      %p112 = scmp.ne.s32.totalorder %s103, %s104
      %p113 = scmp.eq.s32.totalorder %s23, 0
      %p114 = por %p112, %p113
      %p115 = scmp.ne.s32.totalorder %s103, %s104
      %p116 = scmp.eq.s32.totalorder %s24, 1
      %p117 = por %p115, %p116
      %p119 = scmp.ne.s32.totalorder %s104, %s118
      %p120 = scmp.eq.s32.totalorder %s24, 0
      %p121 = por %p119, %p120
      %s123 = sadd.s32 %s122, 1
      %p126 = scmp.eq.s32.totalorder %s18, 1
      %p127 = scmp.ne.s32.totalorder %s122, %s124
      %p128 = scmp.eq.s32.totalorder %s18, 0
      %p129 = por %p127, %p128
      %p130 = scmp.ne.s32.totalorder %s122, %s124
      %p131 = scmp.eq.s32.totalorder %s23, 1
      %p132 = por %p130, %p131
      %p133 = scmp.ne.s32.totalorder %s124, %s125
      %p134 = scmp.eq.s32.totalorder %s23, 0
      %p135 = por %p133, %p134
      %p136 = scmp.ne.s32.totalorder %s124, %s125
      %p137 = scmp.eq.s32.totalorder %s24, 1
      %p138 = por %p136, %p137
      %p140 = scmp.ne.s32.totalorder %s125, %s139
      %p141 = scmp.eq.s32.totalorder %s24, 0
      %p142 = por %p140, %p141
      %s144 = sadd.s32 %s143, 1
      %p147 = scmp.eq.s32.totalorder %s18, 1
      %p148 = scmp.ne.s32.totalorder %s143, %s145
      %p149 = scmp.eq.s32.totalorder %s18, 0
      %p150 = por %p148, %p149
      %p151 = scmp.ne.s32.totalorder %s143, %s145
      %p152 = scmp.eq.s32.totalorder %s23, 1
      %p153 = por %p151, %p152
      %p154 = scmp.ne.s32.totalorder %s145, %s146
      %p155 = scmp.eq.s32.totalorder %s23, 0
      %p156 = por %p154, %p155
      %p157 = scmp.ne.s32.totalorder %s145, %s146
      %p158 = scmp.eq.s32.totalorder %s24, 1
      %p159 = por %p157, %p158
      %p161 = scmp.ne.s32.totalorder %s146, %s160
      %p162 = scmp.eq.s32.totalorder %s24, 0
      %p163 = por %p161, %p162
      %s164 = ssub.s32 %s25, %s37
      %s165 = ssub.s32 %s26, %s33
      %s166 = sor.u32 %s164, %s165
      %p167 = scmp.eq.s32.totalorder %s166, 0
      %s169 = sadd.s32 %s168, 1
      %s170 = scalar_select %p167, %s168, %s169
      %p173 = pneg %p167
      %p174 = scmp.eq.s32.totalorder %s18, 1
      %p175 = por %p173, %p174
      %p176 = scmp.ne.s32.totalorder %s168, %s171
      %p177 = scmp.eq.s32.totalorder %s18, 0
      %p178 = por %p176, %p177
      %p179 = scmp.ne.s32.totalorder %s168, %s171
      %p180 = scmp.eq.s32.totalorder %s23, 1
      %p181 = por %p179, %p180
      %p182 = scmp.ne.s32.totalorder %s171, %s172
      %p183 = scmp.eq.s32.totalorder %s23, 0
      %p184 = por %p182, %p183
      %p185 = scmp.ne.s32.totalorder %s171, %s172
      %p186 = scmp.eq.s32.totalorder %s24, 1
      %p187 = por %p185, %p186
      %p189 = scmp.ne.s32.totalorder %s172, %s188
      %p190 = scmp.eq.s32.totalorder %s24, 0
      %p191 = por %p189, %p190
      %p192 = scmp.le.s32.totalorder 1, %s18
      %p193 = scmp.lt.s32.totalorder %s18, 3
      %p194 = pnand %p192, %p193
      %p195 = pneg %p194
      // Predicated region
      $region9: #{tpu_custom_call.1} parent=5 // pred_check
        _
      $region10: #{tpu_custom_call.1} parent=5 // pred_check_branch
        %197 = sbr.rel (%p194) target = $region12
      $region11: #{tpu_custom_call.1} parent=5 // pred_region
        %s198 = ssub.s32 %s18, 1
        // Predicated region
        $region13: #{tpu_custom_call.1} parent=11 // pred_check
          %p199 = pneg %p51
        $region14: #{tpu_custom_call.1} parent=11 // pred_check_branch
          %201 = sbr.rel (%p199) target = $region16
        $region15: #{tpu_custom_call.1} parent=11 // pred_region
          _
        $region16: #{tpu_custom_call.1} parent=11 // pred_fallthru
          _
        // Predicated region
        $region17: #{tpu_custom_call.1} parent=11 // pred_check
          %p202 = pneg %p72
        $region18: #{tpu_custom_call.1} parent=11 // pred_check_branch
          %204 = sbr.rel (%p202) target = $region20
        $region19: #{tpu_custom_call.1} parent=11 // pred_region
          _
        $region20: #{tpu_custom_call.1} parent=11 // pred_fallthru
          _
        // Predicated region
        $region21: #{tpu_custom_call.1} parent=11 // pred_check
          %p205 = pneg %p93
        $region22: #{tpu_custom_call.1} parent=11 // pred_check_branch
          %207 = sbr.rel (%p205) target = $region24
        $region23: #{tpu_custom_call.1} parent=11 // pred_region
          %s209 = ssub.s32 4096, 4096
          %210 = vsyncadd [#allocation6], %s209
          %s211 = sshll.u32 [#allocation5], 4
          %s212 = int_to_ptr.vmem [resolvable:$true] %s211
          %217 = dma.hbm_to_vmem [thread:$0]  %s3, 4096, %s212, [#allocation6], 256, 256, 16
        $region24: #{tpu_custom_call.1} parent=11 // pred_fallthru
          _
        // Predicated region
        $region25: #{tpu_custom_call.1} parent=11 // pred_check
          %p218 = pneg %p114
        $region26: #{tpu_custom_call.1} parent=11 // pred_check_branch
          %220 = sbr.rel (%p218) target = $region28
        $region27: #{tpu_custom_call.1} parent=11 // pred_region
          _
        $region28: #{tpu_custom_call.1} parent=11 // pred_fallthru
          _
        // Predicated region
        $region29: #{tpu_custom_call.1} parent=11 // pred_check
          %p221 = pneg %p135
        $region30: #{tpu_custom_call.1} parent=11 // pred_check_branch
          %223 = sbr.rel (%p221) target = $region32
        $region31: #{tpu_custom_call.1} parent=11 // pred_region
          _
        $region32: #{tpu_custom_call.1} parent=11 // pred_fallthru
          _
        // Predicated region
        $region33: #{tpu_custom_call.1} parent=11 // pred_check
          %p224 = pneg %p156
        $region34: #{tpu_custom_call.1} parent=11 // pred_check_branch
          %226 = sbr.rel (%p224) target = $region36
        $region35: #{tpu_custom_call.1} parent=11 // pred_region
          %s228 = ssub.s32 2048, 2048
          %229 = vsyncadd [#allocation9], %s228
          %s230 = sshll.u32 [#allocation8], 4
          %s231 = int_to_ptr.vmem [resolvable:$true] %s230
          %236 = dma.hbm_to_vmem [thread:$0]  %s6, 2048, %s231, [#allocation9], 128, 128, 8
        $region36: #{tpu_custom_call.1} parent=11 // pred_fallthru
          _
      $region12: #{tpu_custom_call.1} parent=5 // pred_fallthru
        _
      %p237 = scmp.lt.s32.totalorder %s18, 2
      // Predicated region
      $region37: #{tpu_custom_call.1} parent=5 // pred_check
        %p238 = pneg %p237
      $region38: #{tpu_custom_call.1} parent=5 // pred_check_branch
        %240 = sbr.rel (%p238) target = $region40
      $region39: #{tpu_custom_call.1} parent=5 // pred_region
        _
      $region40: #{tpu_custom_call.1} parent=5 // pred_fallthru
        _
      %p241 = scmp.le.s32.totalorder 1, %s18
      %p242 = scmp.lt.s32.totalorder %s18, 3
      %p243 = pnand %p241, %p242
      %p244 = pneg %p243
      // Predicated region
      $region41: #{tpu_custom_call.1} parent=5 // pred_check
        _
      $region42: #{tpu_custom_call.1} parent=5 // pred_check_branch
        %246 = sbr.rel (%p243) target = $region44
      $region43: #{tpu_custom_call.1} parent=5 // pred_region
        %s247 = ssub.s32 %s18, 1
        // Predicated region
        $region45: #{tpu_custom_call.1} parent=43 // pred_check
          %p248 = pneg %p93
        $region46: #{tpu_custom_call.1} parent=43 // pred_check_branch
          %250 = sbr.rel (%p248) target = $region48
        $region47: #{tpu_custom_call.1} parent=43 // pred_region
          %251 = dma.done [#allocation6], 4096
        $region48: #{tpu_custom_call.1} parent=43 // pred_fallthru
          _
        // Predicated region
        $region49: #{tpu_custom_call.1} parent=43 // pred_check
          %p252 = pneg %p156
        $region50: #{tpu_custom_call.1} parent=43 // pred_check_branch
          %254 = sbr.rel (%p252) target = $region52
        $region51: #{tpu_custom_call.1} parent=43 // pred_region
          %255 = dma.done [#allocation9], 2048
        $region52: #{tpu_custom_call.1} parent=43 // pred_fallthru
          _
        %p256 = pneg %p51
        %p257 = pneg %p48
        %p258 = pneg %p72
        %p259 = pneg %p69
        %p260 = pneg %p93
        %p261 = pneg %p90
        %p262 = pneg %p114
        %p263 = pneg %p111
        %p264 = pneg %p135
        %p265 = pneg %p132
        %p266 = pneg %p156
        %p267 = pneg %p153
        %p268 = pneg %p184
        %p269 = pneg %p181
        %s270 = sand.u32 %s171, 1
        %s271 = scalar_lea.sflag [#allocation7], %s270
        %s272 = sand.u32 %s171, 1
        %s273 = smul.addr %s272, 40
        %s274 = scalar_lea.vmem [#allocation10], %s273
        %s275 = smul.u32 5, %s28
        %p276 = scmp.lt.s32.totalorder %s28, 0
        %s277 = ssub.s32 0, %s28
        %s278 = scalar_select %p276, %s277, %s28
        %s279 = sand.u32 %s278, 1
        %s280 = ssub.s32 0, %s279
        %s281 = scalar_select %p276, %s280, %s279
        %p282 = scmp.ne.s32.totalorder %s281, 0
        %p283 = scmp.lt.s32.totalorder %s281, 0
        %p284 = pnand %p283, %p282
        %p285 = pneg %p284
        %s286 = sadd.s32 %s281, 2
        %s287 = scalar_select %p285, %s286, %s281
        %p288 = scmp.eq.s32.totalorder %s28, 0
        // Predicated region
        $region53: #{tpu_custom_call.1} parent=43 // pred_check
          %p289 = pneg %p288
        $region54: #{tpu_custom_call.1} parent=43 // pred_check_branch
          %291 = sbr.rel (%p289) target = $region56
        $region55: #{tpu_custom_call.1} parent=43 // pred_region
          %s292 = smul.u32 %s27, 40
          %s293 = smul.addr %s292, 16
          %s294 = scalar_lea.hbm %s0, %s293
          %s295 = smul.u32 %s287, 48
          %s296 = sadd.s32 3, %s295
          %s297 = scalar_lea.vmem [#allocation2], %s296
          %s298 = scalar_lea.sflag [#allocation4], %s287
          // Predicated region
          $region57: #{tpu_custom_call.1} parent=55 // pred_check
            _
          $region58: #{tpu_custom_call.1} parent=55 // pred_check_branch
            %300 = sbr.rel target = $region60
          $region59: #{tpu_custom_call.1} parent=55 // pred_region
            %301 = sst [smem:[#allocation13]] [#allocation12]
            %302 = sst [smem:[#allocation14]] [#allocation11]
          $region60: #{tpu_custom_call.1} parent=55 // pred_fallthru
            _
          %304 = shalt.err (0)
          %s306 = sshll.u32 %s297, 4
          %s307 = int_to_ptr.vmem [resolvable:$true] %s306
          %309 = dma.hbm_to_vmem [thread:$0]  %s294, 640, %s307, %s298
        $region56: #{tpu_custom_call.1} parent=43 // pred_fallthru
          _
        %s310 = smul.u32 %s27, 40
        %s311 = smul.addr %s310, 16
        %s312 = scalar_lea.hbm %s0, %s311
        %s313 = scalar_lea.sflag [#allocation4], %s287
        %s314 = smul.u32 40, 1
        %s315 = sshll.u32 %s314, 4
        %316 = dma.done %s313, %s315
        %s317 = sadd.s32 %s28, 1
        %p318 = scmp.lt.s32.totalorder %s317, 1
        // Predicated region
        $region61: #{tpu_custom_call.1} parent=43 // pred_check
          %p319 = pneg %p318
        $region62: #{tpu_custom_call.1} parent=43 // pred_check_branch
          %321 = sbr.rel (%p319) target = $region64
        $region63: #{tpu_custom_call.1} parent=43 // pred_region
          %s322 = ssub.s32 1, %s287
          %s323 = smul.u32 %s322, 48
          %s324 = sadd.s32 3, %s323
          %s325 = scalar_lea.vmem [#allocation2], %s324
          %s326 = scalar_lea.sflag [#allocation4], %s322
          // Predicated region
          $region65: #{tpu_custom_call.1} parent=63 // pred_check
            _
          $region66: #{tpu_custom_call.1} parent=63 // pred_check_branch
            %328 = sbr.rel target = $region68
          $region67: #{tpu_custom_call.1} parent=63 // pred_region
            %329 = sst [smem:[#allocation13]] [#allocation16]
            %330 = sst [smem:[#allocation14]] [#allocation15]
          $region68: #{tpu_custom_call.1} parent=63 // pred_fallthru
            _
          %332 = shalt.err (0)
          %s334 = sshll.u32 %s325, 4
          %s335 = int_to_ptr.vmem [resolvable:$true] %s334
          %337 = dma.hbm_to_vmem [thread:$0]  %s312, 640, %s335, %s326
        $region64: #{tpu_custom_call.1} parent=43 // pred_fallthru
          _
        %s338 = smul.u32 %s287, 48
        %s339 = scalar_lea.vmem [#allocation2], %s338
        %v340 = vld [vmem:[%s339] sm:$0xff]
        %v341 = vld [vmem:[%s339 + $0x8] sm:$0xff]
        %v342 = vld [vmem:[%s339 + $0x10] sm:$0xff]
        %v343 = vld [vmem:[%s339 + $0x18] sm:$0xff]
        %v344 = vld [vmem:[%s339 + $0x20] sm:$0xff]
        %v345 = vld [vmem:[%s339 + $0x28] sm:$0x3f]
        %346 = vadd.xlane.f32.xlu0 %v340
        %v347 = vpop.xlane.xlu0 %346
        %348 = vadd.xlane.f32.xlu0 %v341
        %v349 = vpop.xlane.xlu0 %348
        %350 = vadd.xlane.f32.xlu0 %v342
        %v351 = vpop.xlane.xlu0 %350
        %352 = vadd.xlane.f32.xlu0 %v343
        %v353 = vpop.xlane.xlu0 %352
        %354 = vadd.xlane.f32.xlu0 %v344
        %v355 = vpop.xlane.xlu0 %354
        %vm356 = vcmask 1045504
        %v357 = vsel %vm356, %v345, 0.0
        %358 = vadd.xlane.f32.xlu0 %v357
        %v359 = vpop.xlane.xlu0 %358
        %v360 = vrcp.pop 128.0
        %v361 = vmul.f32 %v347, %v360
        %v362 = vmul.f32 %v349, %v360
        %v363 = vmul.f32 %v351, %v360
        %v364 = vmul.f32 %v353, %v360
        %v365 = vmul.f32 %v355, %v360
        %v366 = vmul.f32 %v359, %v360
        %v367 = vsub.f32 %v340, %v361
        %v368 = vsub.f32 %v341, %v362
        %v369 = vsub.f32 %v342, %v363
        %v370 = vsub.f32 %v343, %v364
        %v371 = vsub.f32 %v344, %v365
        %v372 = vsub.f32 %v345, %v366
        %v373 = vmul.f32 %v367, %v367
        %v374 = vmul.f32 %v368, %v368
        %v375 = vmul.f32 %v369, %v369
        %v376 = vmul.f32 %v370, %v370
        %v377 = vmul.f32 %v371, %v371
        %v378 = vmul.f32 %v372, %v372
        %379 = vadd.xlane.f32.xlu0 %v373
        %v380 = vpop.xlane.xlu0 %379
        %381 = vadd.xlane.f32.xlu0 %v374
        %v382 = vpop.xlane.xlu0 %381
        %383 = vadd.xlane.f32.xlu0 %v375
        %v384 = vpop.xlane.xlu0 %383
        %385 = vadd.xlane.f32.xlu0 %v376
        %v386 = vpop.xlane.xlu0 %385
        %387 = vadd.xlane.f32.xlu0 %v377
        %v388 = vpop.xlane.xlu0 %387
        %v389 = vsel %vm356, %v378, 0.0
        %390 = vadd.xlane.f32.xlu0 %v389
        %v391 = vpop.xlane.xlu0 %390
        %v392 = vmul.f32 %v380, %v360
        %v393 = vmul.f32 %v382, %v360
        %v394 = vmul.f32 %v384, %v360
        %v395 = vmul.f32 %v386, %v360
        %v396 = vmul.f32 %v388, %v360
        %v397 = vmul.f32 %v391, %v360
        %v398 = vadd.f32 %v392, 1e-05
        %v399 = vadd.f32 %v393, 1e-05
        %v400 = vadd.f32 %v394, 1e-05
        %v401 = vadd.f32 %v395, 1e-05
        %v402 = vadd.f32 %v396, 1e-05
        %v403 = vadd.f32 %v397, 1e-05
        %v404 = vrsqrt.pop %v398
        %v405 = vrsqrt.pop %v399
        %v406 = vrsqrt.pop %v400
        %v407 = vrsqrt.pop %v401
        %v408 = vrsqrt.pop %v402
        %v409 = vrsqrt.pop %v403
        %v410 = vmul.f32 %v367, %v404
        %v411 = vmul.f32 %v368, %v405
        %v412 = vmul.f32 %v369, %v406
        %v413 = vmul.f32 %v370, %v407
        %v414 = vmul.f32 %v371, %v408
        %v415 = vmul.f32 %v372, %v409
        %v416 = vld [vmem:[%s1] sm:$0x1]
        %v418 = vlaneseq
        %v419 = vshrl.u32 %v418, 7
        %v420 = vsub.s32 0, %v419
        %v421 = vrot.slane %v416, %v420
        %v423 = vmul.f32 %v410, %v421
        %v424 = vmul.f32 %v411, %v421
        %v425 = vmul.f32 %v412, %v421
        %v426 = vmul.f32 %v413, %v421
        %v427 = vmul.f32 %v414, %v421
        %v428 = vmul.f32 %v415, %v421
        %v429 = vld [vmem:[%s2] sm:$0x1]
        %v431 = vlaneseq
        %v432 = vshrl.u32 %v431, 7
        %v433 = vsub.s32 0, %v432
        %v434 = vrot.slane %v429, %v433
        %v436 = vadd.f32 %v423, %v434
        %v437 = vadd.f32 %v424, %v434
        %v438 = vadd.f32 %v425, %v434
        %v439 = vadd.f32 %v426, %v434
        %v440 = vadd.f32 %v427, %v434
        %v441 = vadd.f32 %v428, %v434
        %v442 = vld [vmem:[#allocation5] sm:$0xff]
        %v443 = vld [vmem:[#allocation5 + $0x8] sm:$0xff]
        %v444 = vld [vmem:[#allocation5 + $0x10] sm:$0xff]
        %v445 = vld [vmem:[#allocation5 + $0x18] sm:$0xff]
        %v446 = vld [vmem:[#allocation5 + $0x20] sm:$0xff]
        %v447 = vld [vmem:[#allocation5 + $0x28] sm:$0xff]
        %v448 = vld [vmem:[#allocation5 + $0x30] sm:$0xff]
        %v449 = vld [vmem:[#allocation5 + $0x38] sm:$0xff]
        %v450 = vld [vmem:[#allocation5 + $0x40] sm:$0xff]
        %v451 = vld [vmem:[#allocation5 + $0x48] sm:$0xff]
        %v452 = vld [vmem:[#allocation5 + $0x50] sm:$0xff]
        %v453 = vld [vmem:[#allocation5 + $0x58] sm:$0xff]
        %v454 = vld [vmem:[#allocation5 + $0x60] sm:$0xff]
        %v455 = vld [vmem:[#allocation5 + $0x68] sm:$0xff]
        %v456 = vld [vmem:[#allocation5 + $0x70] sm:$0xff]
        %v457 = vld [vmem:[#allocation5 + $0x78] sm:$0xff]
        %v458 = vld [vmem:[#allocation5 + $0x80] sm:$0xff]
        %v459 = vld [vmem:[#allocation5 + $0x88] sm:$0xff]
        %v460 = vld [vmem:[#allocation5 + $0x90] sm:$0xff]
        %v461 = vld [vmem:[#allocation5 + $0x98] sm:$0xff]
        %v462 = vld [vmem:[#allocation5 + $0xa0] sm:$0xff]
        %v463 = vld [vmem:[#allocation5 + $0xa8] sm:$0xff]
        %v464 = vld [vmem:[#allocation5 + $0xb0] sm:$0xff]
        %v465 = vld [vmem:[#allocation5 + $0xb8] sm:$0xff]
        %v466 = vld [vmem:[#allocation5 + $0xc0] sm:$0xff]
        %v467 = vld [vmem:[#allocation5 + $0xc8] sm:$0xff]
        %v468 = vld [vmem:[#allocation5 + $0xd0] sm:$0xff]
        %v469 = vld [vmem:[#allocation5 + $0xd8] sm:$0xff]
        %v470 = vld [vmem:[#allocation5 + $0xe0] sm:$0xff]
        %v471 = vld [vmem:[#allocation5 + $0xe8] sm:$0xff]
        %v472 = vld [vmem:[#allocation5 + $0xf0] sm:$0xff]
        %v473 = vld [vmem:[#allocation5 + $0xf8] sm:$0xff]
        %474 = vmatprep.subr.mxu0 %v443
        %475 = vmatpush1.msra.mxu0 %v442
        %476 = vmatprep.subr.mxu0 %v445
        %477 = vmatpush1.msra.mxu0 %v444
        %478 = vmatprep.subr.mxu0 %v447
        %479 = vmatpush1.msra.mxu0 %v446
        %480 = vmatprep.subr.mxu0 %v449
        %481 = vmatpush1.msra.mxu0 %v448
        %482 = vmatprep.subr.mxu0 %v451
        %483 = vmatpush1.msra.mxu0 %v450
        %484 = vmatprep.subr.mxu0 %v453
        %485 = vmatpush1.msra.mxu0 %v452
        %486 = vmatprep.subr.mxu0 %v455
        %487 = vmatpush1.msra.mxu0 %v454
        %488 = vmatprep.subr.mxu0 %v457
        %489 = vmatpush1.msra.mxu0 %v456
        %490 = vmatprep.subr.mxu0 %v459
        %491 = vmatpush1.msra.mxu0 %v458
        %492 = vmatprep.subr.mxu0 %v461
        %493 = vmatpush1.msra.mxu0 %v460
        %494 = vmatprep.subr.mxu0 %v463
        %495 = vmatpush1.msra.mxu0 %v462
        %496 = vmatprep.subr.mxu0 %v465
        %497 = vmatpush1.msra.mxu0 %v464
        %498 = vmatprep.subr.mxu0 %v467
        %499 = vmatpush1.msra.mxu0 %v466
        %500 = vmatprep.subr.mxu0 %v469
        %501 = vmatpush1.msra.mxu0 %v468
        %502 = vmatprep.subr.mxu0 %v471
        %503 = vmatpush1.msra.mxu0 %v470
        %504 = vmatprep.subr.mxu0 %v473
        %505 = vmatpush1.msra.mxu0 %v472
        %506 = vmatprep.subr.mxu0 0.0
        %507 = vmatpush1.msra.mxu0 0.0
        %508 = vmatprep.subr.mxu0 0.0
        %509 = vmatpush1.msra.mxu0 0.0
        %510 = vmatprep.subr.mxu0 0.0
        %511 = vmatpush1.msra.mxu0 0.0
        %512 = vmatprep.subr.mxu0 0.0
        %513 = vmatpush1.msra.mxu0 0.0
        %514 = vmatprep.subr.mxu0 0.0
        %515 = vmatpush1.msra.mxu0 0.0
        %516 = vmatprep.subr.mxu0 0.0
        %517 = vmatpush1.msra.mxu0 0.0
        %518 = vmatprep.subr.mxu0 0.0
        %519 = vmatpush1.msra.mxu0 0.0
        %520 = vmatprep.subr.mxu0 0.0
        %521 = vmatpush1.msra.mxu0 0.0
        %522 = vmatprep.subr.mxu0 0.0
        %523 = vmatpush1.msra.mxu0 0.0
        %524 = vmatprep.subr.mxu0 0.0
        %525 = vmatpush1.msra.mxu0 0.0
        %526 = vmatprep.subr.mxu0 0.0
        %527 = vmatpush1.msra.mxu0 0.0
        %528 = vmatprep.subr.mxu0 0.0
        %529 = vmatpush1.msra.mxu0 0.0
        %530 = vmatprep.subr.mxu0 0.0
        %531 = vmatpush1.msra.mxu0 0.0
        %532 = vmatprep.subr.mxu0 0.0
        %533 = vmatpush1.msra.mxu0 0.0
        %534 = vmatprep.subr.mxu0 0.0
        %535 = vmatpush1.msra.mxu0 0.0
        %536 = vmatprep.subr.mxu0 0.0
        %537 = vmatpush1.msra.mxu0 0.0
        %538 = vmatprep.mubr.f32.mxu0 0.0
        %539 = vmatmul.mubr.f32.gmra.mrb[0].mxu0 %v436
        %v540 = vpop.f32.mrb[0].mxu0
        %v541 = vadd.f32 0.0, %v540
        %v542 = vpop.f32.mrb[0].mxu0
        %v543 = vadd.f32 0.0, %v542
        %544 = vmatprep.mubr.f32.mxu0 0.0
        %545 = vmatmul.mubr.f32.gmra.mrb[0].mxu0 %v437
        %v546 = vpop.f32.mrb[0].mxu0
        %v547 = vadd.f32 0.0, %v546
        %v548 = vpop.f32.mrb[0].mxu0
        %v549 = vadd.f32 0.0, %v548
        %550 = vmatprep.mubr.f32.mxu0 0.0
        %551 = vmatmul.mubr.f32.gmra.mrb[0].mxu0 %v438
        %v552 = vpop.f32.mrb[0].mxu0
        %v553 = vadd.f32 0.0, %v552
        %v554 = vpop.f32.mrb[0].mxu0
        %v555 = vadd.f32 0.0, %v554
        %556 = vmatprep.mubr.f32.mxu0 0.0
        %557 = vmatmul.mubr.f32.gmra.mrb[0].mxu0 %v439
        %v558 = vpop.f32.mrb[0].mxu0
        %v559 = vadd.f32 0.0, %v558
        %v560 = vpop.f32.mrb[0].mxu0
        %v561 = vadd.f32 0.0, %v560
        %562 = vmatprep.mubr.f32.mxu0 0.0
        %563 = vmatmul.mubr.f32.gmra.mrb[0].mxu0 %v440
        %v564 = vpop.f32.mrb[0].mxu0
        %v565 = vadd.f32 0.0, %v564
        %v566 = vpop.f32.mrb[0].mxu0
        %v567 = vadd.f32 0.0, %v566
        %568 = vmatprep.mubr.f32.mxu0 0.0
        %569 = vmatmul.mubr.f32.gmra.mrb[0].mxu0 %v441
        %v570 = vpop.f32.mrb[0].mxu0
        %v571 = vadd.f32 0.0, %v570
        %v572 = vpop.f32.mrb[0].mxu0
        %v573 = vadd.f32 0.0, %v572
        %574 = vdwg.mxu0
        %v575 = vxor.u32 %v543, 2147483648
        %v576 = vxor.u32 %v549, 2147483648
        %v577 = vxor.u32 %v555, 2147483648
        %v578 = vxor.u32 %v561, 2147483648
        %v579 = vxor.u32 %v567, 2147483648
        %v580 = vxor.u32 %v573, 2147483648
        %v581 = vmul.f32 %v575, 1.442695
        %v582 = vpow.pop %v581
        %v583 = vmul.f32 %v576, 1.442695
        %v584 = vpow.pop %v583
        %v585 = vmul.f32 %v577, 1.442695
        %v586 = vpow.pop %v585
        %v587 = vmul.f32 %v578, 1.442695
        %v588 = vpow.pop %v587
        %v589 = vmul.f32 %v579, 1.442695
        %v590 = vpow.pop %v589
        %v591 = vmul.f32 %v580, 1.442695
        %v592 = vpow.pop %v591
        %v593 = vadd.f32 %v582, 1.0
        %v594 = vadd.f32 %v584, 1.0
        %v595 = vadd.f32 %v586, 1.0
        %v596 = vadd.f32 %v588, 1.0
        %v597 = vadd.f32 %v590, 1.0
        %v598 = vadd.f32 %v592, 1.0
        %v599 = vrcp.pop %v593
        %v600 = vmul.f32 1.0, %v599
        %v601 = vrcp.pop %v594
        %v602 = vmul.f32 1.0, %v601
        %v603 = vrcp.pop %v595
        %v604 = vmul.f32 1.0, %v603
        %v605 = vrcp.pop %v596
        %v606 = vmul.f32 1.0, %v605
        %v607 = vrcp.pop %v597
        %v608 = vmul.f32 1.0, %v607
        %v609 = vrcp.pop %v598
        %v610 = vmul.f32 1.0, %v609
        %v611 = vmul.f32 %v541, %v600
        %v612 = vmul.f32 %v547, %v602
        %v613 = vmul.f32 %v553, %v604
        %v614 = vmul.f32 %v559, %v606
        %v615 = vmul.f32 %v565, %v608
        %v616 = vmul.f32 %v571, %v610
        %s617 = smul.u32 %s28, 40
        %s618 = ssub.s32 %s617, 3
        %v619 = vlaneseq
        %v620 = vshrl.u32 %v619, 7
        %v621 = vadd.s32 %v620, 8
        %v622 = vadd.s32 %v620, 16
        %v623 = vadd.s32 %v620, 24
        %v624 = vadd.s32 %v620, 32
        %v625 = vadd.s32 %v620, 40
        %v626 = vstv %s618
        %v627 = vadd.s32 %v626, %v620
        %v628 = vadd.s32 %v626, %v621
        %v629 = vadd.s32 %v626, %v622
        %v630 = vadd.s32 %v626, %v623
        %v631 = vadd.s32 %v626, %v624
        %v632 = vadd.s32 %v626, %v625
        %vm633 = vcmp.ge.s32.totalorder %v627, 0
        %vm634 = vcmp.ge.s32.totalorder %v628, 0
        %vm635 = vcmp.ge.s32.totalorder %v629, 0
        %vm636 = vcmp.ge.s32.totalorder %v630, 0
        %vm637 = vcmp.ge.s32.totalorder %v631, 0
        %vm638 = vcmp.ge.s32.totalorder %v632, 0
        %vm639 = vcmp.lt.s32.totalorder %v627, 40
        %vm640 = vcmp.lt.s32.totalorder %v628, 40
        %vm641 = vcmp.lt.s32.totalorder %v629, 40
        %vm642 = vcmp.lt.s32.totalorder %v630, 40
        %vm643 = vcmp.lt.s32.totalorder %v631, 40
        %vm644 = vcmp.lt.s32.totalorder %v632, 40
        %vm645 = vmand %vm633, %vm639
        %vm646 = vmand %vm634, %vm640
        %vm647 = vmand %vm635, %vm641
        %vm648 = vmand %vm636, %vm642
        %vm649 = vmand %vm637, %vm643
        %vm650 = vmand %vm638, %vm644
        %v651 = vsel %vm645, 1, 0
        %v652 = vsel %vm646, 1, 0
        %v653 = vsel %vm647, 1, 0
        %v654 = vsel %vm648, 1, 0
        %v655 = vsel %vm649, 1, 0
        %v656 = vsel %vm650, 1, 0
        %vm657 = vcmp.eq.s32.totalorder %v651, 1
        %vm658 = vcmp.eq.s32.totalorder %v652, 1
        %vm659 = vcmp.eq.s32.totalorder %v653, 1
        %vm660 = vcmp.eq.s32.totalorder %v654, 1
        %vm661 = vcmp.eq.s32.totalorder %v655, 1
        %vm662 = vcmp.eq.s32.totalorder %v656, 1
        %v663 = vsel %vm657, %v611, 0.0
        %v664 = vsel %vm658, %v612, 0.0
        %v665 = vsel %vm659, %v613, 0.0
        %v666 = vsel %vm660, %v614, 0.0
        %v667 = vsel %vm661, %v615, 0.0
        %v668 = vsel %vm662, %v616, 0.0
        %669 = vst [vmem:[#allocation3] sm:$0xff] %v663
        %670 = vst [vmem:[#allocation3 + $0x8] sm:$0xff] %v664
        %671 = vst [vmem:[#allocation3 + $0x10] sm:$0xff] %v665
        %672 = vst [vmem:[#allocation3 + $0x18] sm:$0xff] %v666
        %673 = vst [vmem:[#allocation3 + $0x20] sm:$0xff] %v667
        %674 = vst [vmem:[#allocation3 + $0x28] sm:$0x3f] %v668
        %v675 = vld [vmem:[#allocation3] sm:$0xff]
        %v676 = vld [vmem:[#allocation3 + $0x8] sm:$0xff]
        %v677 = vld [vmem:[#allocation3 + $0x10] sm:$0xff]
        %v678 = vld [vmem:[#allocation3 + $0x18] sm:$0xff]
        %v679 = vld [vmem:[#allocation3 + $0x20] sm:$0xff]
        %v680 = vld [vmem:[%s4] sm:$0x1]
        %v681 = vlaneseq
        %v682 = vshrl.u32 %v681, 7
        %v683 = vsub.s32 0, %v682
        %v684 = vrot.slane %v680, %v683
        %v685 = vmul.f32 %v675, %v684
        %v686 = vmul.f32 %v676, %v684
        %v687 = vmul.f32 %v677, %v684
        %v688 = vmul.f32 %v678, %v684
        %v689 = vmul.f32 %v679, %v684
        %v690 = vadd.f32 %v685, 0.0
        %v691 = vadd.f32 %v686, 0.0
        %v692 = vadd.f32 %v687, 0.0
        %v693 = vadd.f32 %v688, 0.0
        %v694 = vadd.f32 %v689, 0.0
        %v695 = vld [vmem:[#allocation3 + $0x1] sm:$0xff]
        %v696 = vld [vmem:[#allocation3 + $0x9] sm:$0xff]
        %v697 = vld [vmem:[#allocation3 + $0x11] sm:$0xff]
        %v698 = vld [vmem:[#allocation3 + $0x19] sm:$0xff]
        %v699 = vld [vmem:[#allocation3 + $0x21] sm:$0xff]
        %v700 = vld [vmem:[%s4 + $0x1] sm:$0x1]
        %v701 = vlaneseq
        %v702 = vshrl.u32 %v701, 7
        %v703 = vsub.s32 0, %v702
        %v704 = vrot.slane %v700, %v703
        %v705 = vmul.f32 %v695, %v704
        %v706 = vmul.f32 %v696, %v704
        %v707 = vmul.f32 %v697, %v704
        %v708 = vmul.f32 %v698, %v704
        %v709 = vmul.f32 %v699, %v704
        %v710 = vadd.f32 %v690, %v705
        %v711 = vadd.f32 %v691, %v706
        %v712 = vadd.f32 %v692, %v707
        %v713 = vadd.f32 %v693, %v708
        %v714 = vadd.f32 %v694, %v709
        %v715 = vld [vmem:[#allocation3 + $0x2] sm:$0xff]
        %v716 = vld [vmem:[#allocation3 + $0xa] sm:$0xff]
        %v717 = vld [vmem:[#allocation3 + $0x12] sm:$0xff]
        %v718 = vld [vmem:[#allocation3 + $0x1a] sm:$0xff]
        %v719 = vld [vmem:[#allocation3 + $0x22] sm:$0xff]
        %v720 = vld [vmem:[%s4 + $0x2] sm:$0x1]
        %v721 = vlaneseq
        %v722 = vshrl.u32 %v721, 7
        %v723 = vsub.s32 0, %v722
        %v724 = vrot.slane %v720, %v723
        %v725 = vmul.f32 %v715, %v724
        %v726 = vmul.f32 %v716, %v724
        %v727 = vmul.f32 %v717, %v724
        %v728 = vmul.f32 %v718, %v724
        %v729 = vmul.f32 %v719, %v724
        %v730 = vadd.f32 %v710, %v725
        %v731 = vadd.f32 %v711, %v726
        %v732 = vadd.f32 %v712, %v727
        %v733 = vadd.f32 %v713, %v728
        %v734 = vadd.f32 %v714, %v729
        %v735 = vld [vmem:[#allocation3 + $0x3] sm:$0xff]
        %v736 = vld [vmem:[#allocation3 + $0xb] sm:$0xff]
        %v737 = vld [vmem:[#allocation3 + $0x13] sm:$0xff]
        %v738 = vld [vmem:[#allocation3 + $0x1b] sm:$0xff]
        %v739 = vld [vmem:[#allocation3 + $0x23] sm:$0xff]
        %v740 = vld [vmem:[%s4 + $0x3] sm:$0x1]
        %v741 = vlaneseq
        %v742 = vshrl.u32 %v741, 7
        %v743 = vsub.s32 0, %v742
        %v744 = vrot.slane %v740, %v743
        %v745 = vmul.f32 %v735, %v744
        %v746 = vmul.f32 %v736, %v744
        %v747 = vmul.f32 %v737, %v744
        %v748 = vmul.f32 %v738, %v744
        %v749 = vmul.f32 %v739, %v744
        %v750 = vadd.f32 %v730, %v745
        %v751 = vadd.f32 %v731, %v746
        %v752 = vadd.f32 %v732, %v747
        %v753 = vadd.f32 %v733, %v748
        %v754 = vadd.f32 %v734, %v749
        %v755 = vld [vmem:[#allocation3 + $0x4] sm:$0xff]
        %v756 = vld [vmem:[#allocation3 + $0xc] sm:$0xff]
        %v757 = vld [vmem:[#allocation3 + $0x14] sm:$0xff]
        %v758 = vld [vmem:[#allocation3 + $0x1c] sm:$0xff]
        %v759 = vld [vmem:[#allocation3 + $0x24] sm:$0xff]
        %v760 = vld [vmem:[%s4 + $0x4] sm:$0x1]
        %v761 = vlaneseq
        %v762 = vshrl.u32 %v761, 7
        %v763 = vsub.s32 0, %v762
        %v764 = vrot.slane %v760, %v763
        %v765 = vmul.f32 %v755, %v764
        %v766 = vmul.f32 %v756, %v764
        %v767 = vmul.f32 %v757, %v764
        %v768 = vmul.f32 %v758, %v764
        %v769 = vmul.f32 %v759, %v764
        %v770 = vadd.f32 %v750, %v765
        %v771 = vadd.f32 %v751, %v766
        %v772 = vadd.f32 %v752, %v767
        %v773 = vadd.f32 %v753, %v768
        %v774 = vadd.f32 %v754, %v769
        %v775 = vld [vmem:[#allocation3 + $0x5] sm:$0xff]
        %v776 = vld [vmem:[#allocation3 + $0xd] sm:$0xff]
        %v777 = vld [vmem:[#allocation3 + $0x15] sm:$0xff]
        %v778 = vld [vmem:[#allocation3 + $0x1d] sm:$0xff]
        %v779 = vld [vmem:[#allocation3 + $0x25] sm:$0xff]
        %v780 = vld [vmem:[%s4 + $0x5] sm:$0x1]
        %v781 = vlaneseq
        %v782 = vshrl.u32 %v781, 7
        %v783 = vsub.s32 0, %v782
        %v784 = vrot.slane %v780, %v783
        %v785 = vmul.f32 %v775, %v784
        %v786 = vmul.f32 %v776, %v784
        %v787 = vmul.f32 %v777, %v784
        %v788 = vmul.f32 %v778, %v784
        %v789 = vmul.f32 %v779, %v784
        %v790 = vadd.f32 %v770, %v785
        %v791 = vadd.f32 %v771, %v786
        %v792 = vadd.f32 %v772, %v787
        %v793 = vadd.f32 %v773, %v788
        %v794 = vadd.f32 %v774, %v789
        %v795 = vld [vmem:[#allocation3 + $0x6] sm:$0xff]
        %v796 = vld [vmem:[#allocation3 + $0xe] sm:$0xff]
        %v797 = vld [vmem:[#allocation3 + $0x16] sm:$0xff]
        %v798 = vld [vmem:[#allocation3 + $0x1e] sm:$0xff]
        %v799 = vld [vmem:[#allocation3 + $0x26] sm:$0xff]
        %v800 = vld [vmem:[%s4 + $0x6] sm:$0x1]
        %v801 = vlaneseq
        %v802 = vshrl.u32 %v801, 7
        %v803 = vsub.s32 0, %v802
        %v804 = vrot.slane %v800, %v803
        %v805 = vmul.f32 %v795, %v804
        %v806 = vmul.f32 %v796, %v804
        %v807 = vmul.f32 %v797, %v804
        %v808 = vmul.f32 %v798, %v804
        %v809 = vmul.f32 %v799, %v804
        %v810 = vadd.f32 %v790, %v805
        %v811 = vadd.f32 %v791, %v806
        %v812 = vadd.f32 %v792, %v807
        %v813 = vadd.f32 %v793, %v808
        %v814 = vadd.f32 %v794, %v809
        %v815 = vld [vmem:[%s5] sm:$0x1]
        %v817 = vlaneseq
        %v818 = vshrl.u32 %v817, 7
        %v819 = vsub.s32 0, %v818
        %v820 = vrot.slane %v815, %v819
        %v822 = vadd.f32 %v810, %v820
        %v823 = vadd.f32 %v811, %v820
        %v824 = vadd.f32 %v812, %v820
        %v825 = vadd.f32 %v813, %v820
        %v826 = vadd.f32 %v814, %v820
        %v827 = vxor.u32 %v822, 2147483648
        %v828 = vxor.u32 %v823, 2147483648
        %v829 = vxor.u32 %v824, 2147483648
        %v830 = vxor.u32 %v825, 2147483648
        %v831 = vxor.u32 %v826, 2147483648
        %v832 = vmul.f32 %v827, 1.442695
        %v833 = vpow.pop %v832
        %v834 = vmul.f32 %v828, 1.442695
        %v835 = vpow.pop %v834
        %v836 = vmul.f32 %v829, 1.442695
        %v837 = vpow.pop %v836
        %v838 = vmul.f32 %v830, 1.442695
        %v839 = vpow.pop %v838
        %v840 = vmul.f32 %v831, 1.442695
        %v841 = vpow.pop %v840
        %v842 = vadd.f32 %v833, 1.0
        %v843 = vadd.f32 %v835, 1.0
        %v844 = vadd.f32 %v837, 1.0
        %v845 = vadd.f32 %v839, 1.0
        %v846 = vadd.f32 %v841, 1.0
        %v847 = vrcp.pop %v842
        %v848 = vmul.f32 1.0, %v847
        %v849 = vrcp.pop %v843
        %v850 = vmul.f32 1.0, %v849
        %v851 = vrcp.pop %v844
        %v852 = vmul.f32 1.0, %v851
        %v853 = vrcp.pop %v845
        %v854 = vmul.f32 1.0, %v853
        %v855 = vrcp.pop %v846
        %v856 = vmul.f32 1.0, %v855
        %v857 = vmul.f32 %v822, %v848
        %v858 = vmul.f32 %v823, %v850
        %v859 = vmul.f32 %v824, %v852
        %v860 = vmul.f32 %v825, %v854
        %v861 = vmul.f32 %v826, %v856
        %v862 = vld [vmem:[#allocation8] sm:$0xff]
        %v863 = vld [vmem:[#allocation8 + $0x8] sm:$0xff]
        %v864 = vld [vmem:[#allocation8 + $0x10] sm:$0xff]
        %v865 = vld [vmem:[#allocation8 + $0x18] sm:$0xff]
        %v866 = vld [vmem:[#allocation8 + $0x20] sm:$0xff]
        %v867 = vld [vmem:[#allocation8 + $0x28] sm:$0xff]
        %v868 = vld [vmem:[#allocation8 + $0x30] sm:$0xff]
        %v869 = vld [vmem:[#allocation8 + $0x38] sm:$0xff]
        %v870 = vld [vmem:[#allocation8 + $0x40] sm:$0xff]
        %v871 = vld [vmem:[#allocation8 + $0x48] sm:$0xff]
        %v872 = vld [vmem:[#allocation8 + $0x50] sm:$0xff]
        %v873 = vld [vmem:[#allocation8 + $0x58] sm:$0xff]
        %v874 = vld [vmem:[#allocation8 + $0x60] sm:$0xff]
        %v875 = vld [vmem:[#allocation8 + $0x68] sm:$0xff]
        %v876 = vld [vmem:[#allocation8 + $0x70] sm:$0xff]
        %v877 = vld [vmem:[#allocation8 + $0x78] sm:$0xff]
        %878 = vmatprep.subr.mxu0 0.0
        %879 = vmatpush1.msra.mxu0 %v862
        %880 = vmatprep.subr.mxu0 0.0
        %881 = vmatpush1.msra.mxu0 %v863
        %882 = vmatprep.subr.mxu0 0.0
        %883 = vmatpush1.msra.mxu0 %v864
        %884 = vmatprep.subr.mxu0 0.0
        %885 = vmatpush1.msra.mxu0 %v865
        %886 = vmatprep.subr.mxu0 0.0
        %887 = vmatpush1.msra.mxu0 %v866
        %888 = vmatprep.subr.mxu0 0.0
        %889 = vmatpush1.msra.mxu0 %v867
        %890 = vmatprep.subr.mxu0 0.0
        %891 = vmatpush1.msra.mxu0 %v868
        %892 = vmatprep.subr.mxu0 0.0
        %893 = vmatpush1.msra.mxu0 %v869
        %894 = vmatprep.subr.mxu0 0.0
        %895 = vmatpush1.msra.mxu0 %v870
        %896 = vmatprep.subr.mxu0 0.0
        %897 = vmatpush1.msra.mxu0 %v871
        %898 = vmatprep.subr.mxu0 0.0
        %899 = vmatpush1.msra.mxu0 %v872
        %900 = vmatprep.subr.mxu0 0.0
        %901 = vmatpush1.msra.mxu0 %v873
        %902 = vmatprep.subr.mxu0 0.0
        %903 = vmatpush1.msra.mxu0 %v874
        %904 = vmatprep.subr.mxu0 0.0
        %905 = vmatpush1.msra.mxu0 %v875
        %906 = vmatprep.subr.mxu0 0.0
        %907 = vmatpush1.msra.mxu0 %v876
        %908 = vmatprep.subr.mxu0 0.0
        %909 = vmatpush1.msra.mxu0 %v877
        %910 = vmatprep.subr.mxu0 0.0
        %911 = vmatpush1.msra.mxu0 0.0
        %912 = vmatprep.subr.mxu0 0.0
        %913 = vmatpush1.msra.mxu0 0.0
        %914 = vmatprep.subr.mxu0 0.0
        %915 = vmatpush1.msra.mxu0 0.0
        %916 = vmatprep.subr.mxu0 0.0
        %917 = vmatpush1.msra.mxu0 0.0
        %918 = vmatprep.subr.mxu0 0.0
        %919 = vmatpush1.msra.mxu0 0.0
        %920 = vmatprep.subr.mxu0 0.0
        %921 = vmatpush1.msra.mxu0 0.0
        %922 = vmatprep.subr.mxu0 0.0
        %923 = vmatpush1.msra.mxu0 0.0
        %924 = vmatprep.subr.mxu0 0.0
        %925 = vmatpush1.msra.mxu0 0.0
        %926 = vmatprep.subr.mxu0 0.0
        %927 = vmatpush1.msra.mxu0 0.0
        %928 = vmatprep.subr.mxu0 0.0
        %929 = vmatpush1.msra.mxu0 0.0
        %930 = vmatprep.subr.mxu0 0.0
        %931 = vmatpush1.msra.mxu0 0.0
        %932 = vmatprep.subr.mxu0 0.0
        %933 = vmatpush1.msra.mxu0 0.0
        %934 = vmatprep.subr.mxu0 0.0
        %935 = vmatpush1.msra.mxu0 0.0
        %936 = vmatprep.subr.mxu0 0.0
        %937 = vmatpush1.msra.mxu0 0.0
        %938 = vmatprep.subr.mxu0 0.0
        %939 = vmatpush1.msra.mxu0 0.0
        %940 = vmatprep.subr.mxu0 0.0
        %941 = vmatpush1.msra.mxu0 0.0
        %942 = vmatprep.mubr.f32.mxu0 0.0
        %943 = vmatmul.mubr.f32.gmra.mrb[0].mxu0 %v857
        %v944 = vpop.f32.mrb[0].mxu0
        %v945 = vadd.f32 0.0, %v944
        %v946 = vpop.f32.mrb[0].mxu0
        %947 = vmatprep.mubr.f32.mxu0 0.0
        %948 = vmatmul.mubr.f32.gmra.mrb[0].mxu0 %v858
        %v949 = vpop.f32.mrb[0].mxu0
        %v950 = vadd.f32 0.0, %v949
        %v951 = vpop.f32.mrb[0].mxu0
        %952 = vmatprep.mubr.f32.mxu0 0.0
        %953 = vmatmul.mubr.f32.gmra.mrb[0].mxu0 %v859
        %v954 = vpop.f32.mrb[0].mxu0
        %v955 = vadd.f32 0.0, %v954
        %v956 = vpop.f32.mrb[0].mxu0
        %957 = vmatprep.mubr.f32.mxu0 0.0
        %958 = vmatmul.mubr.f32.gmra.mrb[0].mxu0 %v860
        %v959 = vpop.f32.mrb[0].mxu0
        %v960 = vadd.f32 0.0, %v959
        %v961 = vpop.f32.mrb[0].mxu0
        %962 = vmatprep.mubr.f32.mxu0 0.0
        %963 = vmatmul.mubr.f32.gmra.mrb[0].mxu0 %v861
        %v964 = vpop.f32.mrb[0].mxu0
        %v965 = vadd.f32 0.0, %v964
        %v966 = vpop.f32.mrb[0].mxu0
        %967 = vdwg.mxu0
        %968 = vst [vmem:[%s274] sm:$0xff] %v945
        %969 = vst [vmem:[%s274 + $0x8] sm:$0xff] %v950
        %970 = vst [vmem:[%s274 + $0x10] sm:$0xff] %v955
        %971 = vst [vmem:[%s274 + $0x18] sm:$0xff] %v960
        %972 = vst [vmem:[%s274 + $0x20] sm:$0xff] %v965
        %s973 = sand.u32 %s171, 1
        %s974 = scalar_lea.sflag [#allocation7], %s973
        %s975 = sand.u32 %s171, 1
        %s976 = smul.addr %s975, 40
        %s977 = scalar_lea.vmem [#allocation10], %s976
        // Predicated region
        $region69: #{tpu_custom_call.1} parent=43 // pred_check
          %p978 = pneg %p181
        $region70: #{tpu_custom_call.1} parent=43 // pred_check_branch
          %980 = sbr.rel (%p978) target = $region72
        $region71: #{tpu_custom_call.1} parent=43 // pred_region
          %s981 = smul.u32 5, %s28
          %s983 = ssub.s32 640, 640
          %984 = vsyncadd %s974, %s983
          %s985 = smul.addr %s27, 5
          %s986 = sadd.s32 %s981, %s985
          %s987 = smul.addr %s986, 128
          %s988 = scalar_lea.hbm %s7, %s987
          %s989 = sshll.u32 %s977, 4
          %s990 = int_to_ptr.vmem [resolvable:$true] %s989
          %995 = dma.vmem_to_hbm [thread:$0]  %s990, 640, %s988, %s974, 128, 128, 8
        $region72: #{tpu_custom_call.1} parent=43 // pred_fallthru
          _
      $region44: #{tpu_custom_call.1} parent=5 // pred_fallthru
        _
      %p996 = scmp.le.s32.totalorder 2, %s18
      // Predicated region
      $region73: #{tpu_custom_call.1} parent=5 // pred_check
        %p997 = pneg %p996
      $region74: #{tpu_custom_call.1} parent=5 // pred_check_branch
        %999 = sbr.rel (%p997) target = $region76
      $region75: #{tpu_custom_call.1} parent=5 // pred_region
        %s1000 = ssub.s32 %s18, 2
        // Predicated region
        $region77: #{tpu_custom_call.1} parent=75 // pred_check
          %p1001 = pneg %p187
        $region78: #{tpu_custom_call.1} parent=75 // pred_check_branch
          %1003 = sbr.rel (%p1001) target = $region80
        $region79: #{tpu_custom_call.1} parent=75 // pred_region
          %s1004 = sand.u32 %s172, 1
          %s1005 = scalar_lea.sflag [#allocation7], %s1004
          %s1006 = sand.u32 %s172, 1
          %s1007 = smul.addr %s1006, 40
          %s1008 = scalar_lea.vmem [#allocation10], %s1007
          %1009 = dma.done %s1005, 640
        $region80: #{tpu_custom_call.1} parent=75 // pred_fallthru
          _
      $region76: #{tpu_custom_call.1} parent=5 // pred_fallthru
        _
    $region6: #{tpu_custom_call.1} parent=1 // loop_footer
      %s22 = sadd.s32 1, %s18
    $region7: #{tpu_custom_call.1} parent=1 // loop_footer_branch
      %17 = sbr.rel target = $region3
    $region8: #{tpu_custom_call.1} parent=1 // loop_exit
      _
    %1010 = vsyncpa [#allocation6], 1
    %s1011 = scalar_lea.sflag [#allocation6], 1
    %1012 = vsyncpa %s1011, 1
    %1013 = vsyncpa [#allocation9], 1
    %1014 = vsyncpa [#allocation7], 1
    %s1015 = scalar_lea.sflag [#allocation7], 1
    %1016 = vsyncpa %s1015, 1
  %1017 = vsyncmov [#allocation4]
  %s1018 = vpop.sfrf %1017
  %p1019 = scmp.eq.s32.totalorder %s1018, 0
  %p1020 = pneg %p1019
  %1022 = shalt.err (%p1020)
  %s1023 = scalar_lea.sflag [#allocation4], 1
  %1024 = vsyncmov %s1023
  %s1025 = vpop.sfrf %1024
  %p1026 = scmp.eq.s32.totalorder %s1025, 0
  %p1027 = pneg %p1026
  %1029 = shalt.err (%p1027)

</llo_original>
